<compile_context>
chip_gen: v7x
topology: tpu7x:2x2x1
jax: 0.10.0
libtpu: 0.0.40
codegen_flags: <defaults>
</compile_context>

<pallas_src>
import functools

import jax
import jax.numpy as jnp
from jax.experimental import pallas as pl
from jax.experimental.pallas import tpu as pltpu


def _round_up(x, m):
    return ((x + m - 1) // m) * m


# ---------------------------------------------------------------------------
# Fused Pallas kernel: embedding-out -> [conv+relu+mask]* -> mapping -> MLP head
# ---------------------------------------------------------------------------

def _fused_dna_kernel(x_ref, m_ref, *refs, num_conv, K, L, BT, P):
    # x_ref : (BT, L, C0)  bf16   embedded, masked, channel-padded input
    # m_ref : (BT, L, 1)   f32    sequence mask
    # refs  : [convW0,convB0, convW1,convB1, ...,
    #          map_w, map_b, mlp_w1, mlp_b1, mlp_w2, mlp_b2, o_ref, buf_ref]
    conv_refs = refs[: 2 * num_conv]
    (map_w_ref, map_b_ref, w1_ref, b1_ref, w2_ref, b2_ref,
     o_ref, buf_ref) = refs[2 * num_conv:]

    mask = m_ref[...]                        # (BT, L, 1) f32
    x = x_ref[...]                           # (BT, L, C0) bf16

    # ---- conv stack (activation stays in VMEM between layers) ----
    for li in range(num_conv):
        w_ref = conv_refs[2 * li]            # (K, Cin, Cout) bf16
        b_ref = conv_refs[2 * li + 1]        # (1, Cout)      f32
        Cin, Cout = w_ref.shape[1], w_ref.shape[2]

        # Stage layer input into the halo buffer; halo rows are zero (== zero padding).
        buf_ref[...] = jnp.zeros_like(buf_ref)
        buf_ref[:, P:P + L, :Cin] = x

        # Conv1d(K, stride=1, pad=P) as K shifted matmuls on the MXU,
        # with M = BT*L rows per matmul (taller tiles than per-sequence L).
        acc = jnp.zeros((BT * L, Cout), jnp.float32)
        for k in range(K):                   # K is small & static -> unrolled
            xk = buf_ref[:, k:k + L, :Cin].reshape(BT * L, Cin)
            acc = acc + jnp.dot(xk, w_ref[k], preferred_element_type=jnp.float32)
        acc = acc + b_ref[0][None, :]
        acc = jnp.maximum(acc, 0.0)                              # relu
        acc = acc.reshape(BT, L, Cout) * mask                    # hidden * mask
        x = acc.astype(jnp.bfloat16)

    # ---- mapping Linear + shared MLP head, still on (BT*L, H) tiles ----
    H = x.shape[-1]
    x2 = x.reshape(BT * L, H)
    h = jnp.dot(x2, map_w_ref[...], preferred_element_type=jnp.float32)
    h = h + map_b_ref[0][None, :]

    h1 = jnp.dot(h.astype(jnp.bfloat16), w1_ref[...],
                 preferred_element_type=jnp.float32) + b1_ref[0][None, :]
    h1 = jnp.maximum(h1, 0.0)
    out = jnp.dot(h1.astype(jnp.bfloat16), w2_ref[...],
                  preferred_element_type=jnp.float32) + b2_ref[0][None, :]

    o_ref[...] = out.reshape(BT, L, out.shape[-1]).astype(o_ref.dtype)


def _const_spec(shape):
    zeros = (0,) * len(shape)
    return pl.BlockSpec(shape, lambda i, z=zeros: z)


# ---------------------------------------------------------------------------
# Forward wrapper (one pallas_call for both sequences)
# ---------------------------------------------------------------------------

def dna_classifier_forward(input_ids_1, mask_1, input_ids_2, mask_2, params,
                           *, padding, bt=None):
    B, L = input_ids_1.shape
    K = params["convs"][0][0].shape[0]
    assert 2 * padding == K - 1, "conv must be 'same' so the mask multiply is valid"

    # Both sequences share all weights -> process them in ONE launch.
    ids = jnp.concatenate([input_ids_1, input_ids_2], axis=0)         # (2B, L)
    mask = jnp.concatenate([mask_1, mask_2], axis=0)                  # (2B, L)
    m3 = mask[..., None].astype(jnp.float32)                          # (2B, L, 1)

    # Embedding lookup (tiny gather, kept as plain JAX) + mask, then pad channels
    # to a lane-dense 128 so the first conv input never streams a 9-lane tensor.
    emb = params["emb"]
    vocab = emb.shape[1]
    C0 = _round_up(vocab, 128)
    x0 = (emb[ids] * m3).astype(jnp.bfloat16)
    x0 = jnp.pad(x0, ((0, 0), (0, 0), (0, C0 - vocab)))               # (2B, L, C0)

    # bf16 weights (f32 biases); first conv Cin zero-padded to match C0.
    conv_ops = []
    for li, (w, b) in enumerate(params["convs"]):
        wk = w
        if li == 0:
            wk = jnp.pad(wk, ((0, 0), (0, C0 - vocab), (0, 0)))
        conv_ops.append((wk.astype(jnp.bfloat16),
                         b.reshape(1, -1).astype(jnp.float32)))

    Dout = params["mlp_w2"].shape[1]
    DP = _round_up(Dout, 128)                                         # lane-dense output slab
    map_w = params["map_w"].astype(jnp.bfloat16)
    map_b = params["map_b"].reshape(1, -1).astype(jnp.float32)
    w1 = params["mlp_w1"].astype(jnp.bfloat16)
    b1 = params["mlp_b1"].reshape(1, -1).astype(jnp.float32)
    w2 = jnp.pad(params["mlp_w2"], ((0, 0), (0, DP - Dout))).astype(jnp.bfloat16)
    b2 = jnp.pad(params["mlp_b2"], (0, DP - Dout)).reshape(1, -1).astype(jnp.float32)

    NB = 2 * B
    if bt is None:
        # Keep >= 2 grid steps so v7x can shard across its 2 TensorCores.
        bt = NB // 2 if (NB >= 2 and NB % 2 == 0) else NB
    assert NB % bt == 0
    grid = (NB // bt,)

    Lp = L + 2 * padding
    Cmax = max(w.shape[1] for (w, _) in conv_ops)

    flat_weights, weight_specs = [], []
    for (w, b) in conv_ops:
        flat_weights += [w, b]
        weight_specs += [_const_spec(w.shape), _const_spec(b.shape)]
    for t in (map_w, map_b, w1, b1, w2, b2):
        flat_weights.append(t)
        weight_specs.append(_const_spec(t.shape))

    out = pl.pallas_call(
        functools.partial(_fused_dna_kernel, num_conv=len(conv_ops),
                          K=K, L=L, BT=bt, P=padding),
        out_shape=jax.ShapeDtypeStruct((NB, L, DP), jnp.float32),
        grid=grid,
        in_specs=[
            pl.BlockSpec((bt, L, C0), lambda i: (i, 0, 0)),
            pl.BlockSpec((bt, L, 1), lambda i: (i, 0, 0)),
            *weight_specs,
        ],
        out_specs=pl.BlockSpec((bt, L, DP), lambda i: (i, 0, 0)),
        scratch_shapes=[pltpu.VMEM((bt, Lp, Cmax), jnp.bfloat16)],
        compiler_params=pltpu.CompilerParams(dimension_semantics=("parallel",)),
    )(x0, m3, *flat_weights)

    logits = out[:, :, :Dout]                                         # (2B, L, Dout)
    # torch.cat([logits_1, logits_2], dim=1)
    return jnp.concatenate([logits[:B], logits[B:]], axis=1)          # (B, 2L, Dout)


# ---------------------------------------------------------------------------
# Parameter init
# ---------------------------------------------------------------------------

def init_params(key, vocab_size, hidden_dims, kernel_size, output_dim):
    dims = [vocab_size] + list(hidden_dims)
    H = hidden_dims[-1]
    keys = jax.random.split(key, 2 * len(hidden_dims) + 8)
    ki = iter(keys)

    def nrm(k, shape, scale):
        return jax.random.normal(k, shape, jnp.float32) * scale

    params = {
        "emb": nrm(next(ki), (vocab_size, vocab_size), 0.1),
        "convs": [],
        "map_w": nrm(next(ki), (H, H), 0.05),
        "map_b": nrm(next(ki), (H,), 0.01),
        "mlp_w1": nrm(next(ki), (H, H), 0.05),
        "mlp_b1": nrm(next(ki), (H,), 0.01),
        "mlp_w2": nrm(next(ki), (H, output_dim), 0.05),
        "mlp_b2": nrm(next(ki), (output_dim,), 0.01),
    }
    for i in range(len(dims) - 1):
        w = nrm(next(ki), (kernel_size, dims[i], dims[i + 1]), 0.05)
        b = nrm(next(ki), (dims[i + 1],), 0.01)
        params["convs"].append((w, b))
    return params


# ---------------------------------------------------------------------------
# Pure-JAX reference (mirrors the kernel's bf16-compute / f32-accumulate scheme)
# ---------------------------------------------------------------------------

def reference_forward(ids1, m1, ids2, m2, params, *, padding):
    def fe(ids, m):
        m3 = m[..., None].astype(jnp.float32)
        x = (params["emb"][ids] * m3).astype(jnp.bfloat16)
        for (w, b) in params["convs"]:
            K = w.shape[0]
            L = x.shape[1]
            xp = jnp.pad(x, ((0, 0), (padding, padding), (0, 0)))
            acc = jnp.zeros((x.shape[0], L, w.shape[2]), jnp.float32)
            for k in range(K):
                acc = acc + jnp.einsum("blc,co->blo", xp[:, k:k + L, :],
                                       w[k].astype(jnp.bfloat16),
                                       preferred_element_type=jnp.float32)
            acc = acc + b[None, None, :]
            x = (jnp.maximum(acc, 0.0) * m3).astype(jnp.bfloat16)
        h = jnp.einsum("blc,co->blo", x, params["map_w"].astype(jnp.bfloat16),
                       preferred_element_type=jnp.float32) + params["map_b"]
        return h

    def head(h):
        h1 = jnp.einsum("blc,co->blo", h.astype(jnp.bfloat16),
                        params["mlp_w1"].astype(jnp.bfloat16),
                        preferred_element_type=jnp.float32) + params["mlp_b1"]
        h1 = jnp.maximum(h1, 0.0)
        return jnp.einsum("blc,co->blo", h1.astype(jnp.bfloat16),
                          params["mlp_w2"].astype(jnp.bfloat16),
                          preferred_element_type=jnp.float32) + params["mlp_b2"]

    return jnp.concatenate([head(fe(ids1, m1)), head(fe(ids2, m2))], axis=1)


# ---------------------------------------------------------------------------
if __name__ == "__main__":
    # Small demo shapes (structure matches the PyTorch module; hidden 1024 -> 128).
    B, L = 2, 16
    VOCAB = 9
    HIDDEN_DIMS = [128, 128]
    KERNEL_SIZE, PADDING = 5, 2
    OUTPUT_DIM = 2

    key = jax.random.PRNGKey(0)
    kp, k1, k2, kl1, kl2 = jax.random.split(key, 5)

    params = init_params(kp, VOCAB, HIDDEN_DIMS, KERNEL_SIZE, OUTPUT_DIM)

    input_ids_1 = jax.random.randint(k1, (B, L), 0, VOCAB, dtype=jnp.int32)
    input_ids_2 = jax.random.randint(k2, (B, L), 0, VOCAB, dtype=jnp.int32)
    len1 = jax.random.randint(kl1, (B,), L // 2, L + 1)
    len2 = jax.random.randint(kl2, (B,), L // 2, L + 1)
    pos = jnp.arange(L)[None, :]
    mask_1 = (pos < len1[:, None]).astype(jnp.int32)
    mask_2 = (pos < len2[:, None]).astype(jnp.int32)

    fwd = jax.jit(functools.partial(dna_classifier_forward, padding=PADDING))
    logits = fwd(input_ids_1, mask_1, input_ids_2, mask_2, params)
    jax.block_until_ready(logits)

    assert logits.shape == (B, 2 * L, OUTPUT_DIM), logits.shape

    ref = reference_forward(input_ids_1, mask_1, input_ids_2, mask_2, params,
                            padding=PADDING)
    # bf16 compute / f32 accumulate in both paths -> only accumulation-order noise.
    assert jnp.allclose(logits, ref, atol=2e-3, rtol=2e-2), "mismatch vs reference"

    print("KERNEL_OK")
</pallas_src>

<mosaic_0001>
module attributes {stable_mosaic.version = 11 : i64} {
  func.func @_fused_dna_kernel(%arg0: i32, %arg1: memref<2x16x128xbf16, #tpu.memory_space<vmem>>, %arg2: memref<2x16x1xf32, #tpu.memory_space<vmem>>, %arg3: memref<5x128x128xbf16, #tpu.memory_space<vmem>>, %arg4: memref<1x128xf32, #tpu.memory_space<vmem>>, %arg5: memref<5x128x128xbf16, #tpu.memory_space<vmem>>, %arg6: memref<1x128xf32, #tpu.memory_space<vmem>>, %arg7: memref<128x128xbf16, #tpu.memory_space<vmem>>, %arg8: memref<1x128xf32, #tpu.memory_space<vmem>>, %arg9: memref<128x128xbf16, #tpu.memory_space<vmem>>, %arg10: memref<1x128xf32, #tpu.memory_space<vmem>>, %arg11: memref<128x128xbf16, #tpu.memory_space<vmem>>, %arg12: memref<1x128xf32, #tpu.memory_space<vmem>>, %arg13: memref<2x16x128xf32, #tpu.memory_space<vmem>>, %arg14: memref<2x20x128xbf16, #tpu.memory_space<vmem>>) attributes {dimension_semantics = [#tpu.dimension_semantics<parallel>], iteration_bounds = array<i64: 2>, scalar_prefetch = 0 : i64, scratch_operands = 1 : i64, tpu.core_type = #tpu.core_type<tc>, window_params = [{transform_indices = @transform_0, window_bounds = array<i64: 2, 16, 128>}, {transform_indices = @transform_1, window_bounds = array<i64: 2, 16, 1>}, {pipeline_mode = #tpu.pipeline_mode<synchronous>, transform_indices = @transform_2, window_bounds = array<i64: 5, 128, 128>}, {pipeline_mode = #tpu.pipeline_mode<synchronous>, transform_indices = @transform_3, window_bounds = array<i64: 1, 128>}, {pipeline_mode = #tpu.pipeline_mode<synchronous>, transform_indices = @transform_4, window_bounds = array<i64: 5, 128, 128>}, {pipeline_mode = #tpu.pipeline_mode<synchronous>, transform_indices = @transform_5, window_bounds = array<i64: 1, 128>}, {pipeline_mode = #tpu.pipeline_mode<synchronous>, transform_indices = @transform_6, window_bounds = array<i64: 128, 128>}, {pipeline_mode = #tpu.pipeline_mode<synchronous>, transform_indices = @transform_7, window_bounds = array<i64: 1, 128>}, {pipeline_mode = #tpu.pipeline_mode<synchronous>, transform_indices = @transform_8, window_bounds = array<i64: 128, 128>}, {pipeline_mode = #tpu.pipeline_mode<synchronous>, transform_indices = @transform_9, window_bounds = array<i64: 1, 128>}, {pipeline_mode = #tpu.pipeline_mode<synchronous>, transform_indices = @transform_10, window_bounds = array<i64: 128, 128>}, {pipeline_mode = #tpu.pipeline_mode<synchronous>, transform_indices = @transform_11, window_bounds = array<i64: 1, 128>}, {transform_indices = @transform_12, window_bounds = array<i64: 2, 16, 128>}]} {
    %c0 = arith.constant 0 : index
    %c0_0 = arith.constant 0 : index
    %c0_1 = arith.constant 0 : index
    %0 = vector.load %arg2[%c0, %c0_0, %c0_1] : memref<2x16x1xf32, #tpu.memory_space<vmem>>, vector<2x16x1xf32>
    %c0_2 = arith.constant 0 : index
    %c0_3 = arith.constant 0 : index
    %c0_4 = arith.constant 0 : index
    %1 = vector.load %arg1[%c0_2, %c0_3, %c0_4] : memref<2x16x128xbf16, #tpu.memory_space<vmem>>, vector<2x16x128xbf16>
    %cst = arith.constant 0.000000e+00 : bf16
    %2 = vector.broadcast %cst : bf16 to vector<2x20x128xbf16>
    %c0_5 = arith.constant 0 : index
    %c0_6 = arith.constant 0 : index
    %c0_7 = arith.constant 0 : index
    %3 = vector.load %arg14[%c0_5, %c0_6, %c0_7] : memref<2x20x128xbf16, #tpu.memory_space<vmem>>, vector<2x20x128xbf16>
    tpu.vector_store %arg14[%c0_5, %c0_6, %c0_7], %2 {strides = array<i32>} : memref<2x20x128xbf16, #tpu.memory_space<vmem>>, vector<2x20x128xbf16>,
    %c0_8 = arith.constant 0 : index
    %c2 = arith.constant 2 : index
    %c0_9 = arith.constant 0 : index
    %4 = vector.load %arg14[%c0_8, %c2, %c0_9] : memref<2x20x128xbf16, #tpu.memory_space<vmem>>, vector<2x16x128xbf16>
    tpu.vector_store %arg14[%c0_8, %c2, %c0_9], %1 {strides = array<i32>} : memref<2x20x128xbf16, #tpu.memory_space<vmem>>, vector<2x16x128xbf16>,
    %cst_10 = arith.constant 0.000000e+00 : f32
    %5 = vector.broadcast %cst_10 : f32 to vector<32x128xf32>
    %c0_11 = arith.constant 0 : index
    %c0_12 = arith.constant 0 : index
    %c0_13 = arith.constant 0 : index
    %6 = vector.load %arg14[%c0_11, %c0_12, %c0_13] : memref<2x20x128xbf16, #tpu.memory_space<vmem>>, vector<2x16x128xbf16>
    %7 = vector.shape_cast %6 : vector<2x16x128xbf16> to vector<32x128xbf16>
    %c0_14 = arith.constant 0 : index
    %c0_15 = arith.constant 0 : index
    %c0_16 = arith.constant 0 : index
    %8 = vector.load %arg3[%c0_14, %c0_15, %c0_16] : memref<5x128x128xbf16, #tpu.memory_space<vmem>>, vector<1x128x128xbf16>
    %9 = vector.shape_cast %8 : vector<1x128x128xbf16> to vector<128x128xbf16>
    %cst_17 = arith.constant dense<0.000000e+00> : vector<32x128xf32>
    %10 = tpu.matmul %7, %9, %cst_17 {dimension_numbers = #tpu.dot_dimension_numbers<[1], [0], [0], [1], [0, 0, 1, 1], [], []>} : vector<32x128xbf16>, vector<128x128xbf16>, vector<32x128xf32> -> vector<32x128xf32>
    %11 = arith.addf %5, %10 : vector<32x128xf32>
    %c0_18 = arith.constant 0 : index
    %c1 = arith.constant 1 : index
    %c0_19 = arith.constant 0 : index
    %12 = vector.load %arg14[%c0_18, %c1, %c0_19] : memref<2x20x128xbf16, #tpu.memory_space<vmem>>, vector<2x16x128xbf16>
    %13 = vector.shape_cast %12 : vector<2x16x128xbf16> to vector<32x128xbf16>
    %c1_20 = arith.constant 1 : index
    %c0_21 = arith.constant 0 : index
    %c0_22 = arith.constant 0 : index
    %14 = vector.load %arg3[%c1_20, %c0_21, %c0_22] : memref<5x128x128xbf16, #tpu.memory_space<vmem>>, vector<1x128x128xbf16>
    %15 = vector.shape_cast %14 : vector<1x128x128xbf16> to vector<128x128xbf16>
    %cst_23 = arith.constant dense<0.000000e+00> : vector<32x128xf32>
    %16 = tpu.matmul %13, %15, %cst_23 {dimension_numbers = #tpu.dot_dimension_numbers<[1], [0], [0], [1], [0, 0, 1, 1], [], []>} : vector<32x128xbf16>, vector<128x128xbf16>, vector<32x128xf32> -> vector<32x128xf32>
    %17 = arith.addf %11, %16 : vector<32x128xf32>
    %c0_24 = arith.constant 0 : index
    %c2_25 = arith.constant 2 : index
    %c0_26 = arith.constant 0 : index
    %18 = vector.load %arg14[%c0_24, %c2_25, %c0_26] : memref<2x20x128xbf16, #tpu.memory_space<vmem>>, vector<2x16x128xbf16>
    %19 = vector.shape_cast %18 : vector<2x16x128xbf16> to vector<32x128xbf16>
    %c2_27 = arith.constant 2 : index
    %c0_28 = arith.constant 0 : index
    %c0_29 = arith.constant 0 : index
    %20 = vector.load %arg3[%c2_27, %c0_28, %c0_29] : memref<5x128x128xbf16, #tpu.memory_space<vmem>>, vector<1x128x128xbf16>
    %21 = vector.shape_cast %20 : vector<1x128x128xbf16> to vector<128x128xbf16>
    %cst_30 = arith.constant dense<0.000000e+00> : vector<32x128xf32>
    %22 = tpu.matmul %19, %21, %cst_30 {dimension_numbers = #tpu.dot_dimension_numbers<[1], [0], [0], [1], [0, 0, 1, 1], [], []>} : vector<32x128xbf16>, vector<128x128xbf16>, vector<32x128xf32> -> vector<32x128xf32>
    %23 = arith.addf %17, %22 : vector<32x128xf32>
    %c0_31 = arith.constant 0 : index
    %c3 = arith.constant 3 : index
    %c0_32 = arith.constant 0 : index
    %24 = vector.load %arg14[%c0_31, %c3, %c0_32] : memref<2x20x128xbf16, #tpu.memory_space<vmem>>, vector<2x16x128xbf16>
    %25 = vector.shape_cast %24 : vector<2x16x128xbf16> to vector<32x128xbf16>
    %c3_33 = arith.constant 3 : index
    %c0_34 = arith.constant 0 : index
    %c0_35 = arith.constant 0 : index
    %26 = vector.load %arg3[%c3_33, %c0_34, %c0_35] : memref<5x128x128xbf16, #tpu.memory_space<vmem>>, vector<1x128x128xbf16>
    %27 = vector.shape_cast %26 : vector<1x128x128xbf16> to vector<128x128xbf16>
    %cst_36 = arith.constant dense<0.000000e+00> : vector<32x128xf32>
    %28 = tpu.matmul %25, %27, %cst_36 {dimension_numbers = #tpu.dot_dimension_numbers<[1], [0], [0], [1], [0, 0, 1, 1], [], []>} : vector<32x128xbf16>, vector<128x128xbf16>, vector<32x128xf32> -> vector<32x128xf32>
    %29 = arith.addf %23, %28 : vector<32x128xf32>
    %c0_37 = arith.constant 0 : index
    %c4 = arith.constant 4 : index
    %c0_38 = arith.constant 0 : index
    %30 = vector.load %arg14[%c0_37, %c4, %c0_38] : memref<2x20x128xbf16, #tpu.memory_space<vmem>>, vector<2x16x128xbf16>
    %31 = vector.shape_cast %30 : vector<2x16x128xbf16> to vector<32x128xbf16>
    %c4_39 = arith.constant 4 : index
    %c0_40 = arith.constant 0 : index
    %c0_41 = arith.constant 0 : index
    %32 = vector.load %arg3[%c4_39, %c0_40, %c0_41] : memref<5x128x128xbf16, #tpu.memory_space<vmem>>, vector<1x128x128xbf16>
    %33 = vector.shape_cast %32 : vector<1x128x128xbf16> to vector<128x128xbf16>
    %cst_42 = arith.constant dense<0.000000e+00> : vector<32x128xf32>
    %34 = tpu.matmul %31, %33, %cst_42 {dimension_numbers = #tpu.dot_dimension_numbers<[1], [0], [0], [1], [0, 0, 1, 1], [], []>} : vector<32x128xbf16>, vector<128x128xbf16>, vector<32x128xf32> -> vector<32x128xf32>
    %35 = arith.addf %29, %34 : vector<32x128xf32>
    %c0_43 = arith.constant 0 : index
    %c0_44 = arith.constant 0 : index
    %36 = vector.load %arg4[%c0_43, %c0_44] : memref<1x128xf32, #tpu.memory_space<vmem>>, vector<1x128xf32>
    %37 = vector.shape_cast %36 : vector<1x128xf32> to vector<128xf32>
    %38 = vector.shape_cast %37 : vector<128xf32> to vector<1x128xf32>
    %39 = vector.broadcast %38 : vector<1x128xf32> to vector<32x128xf32>
    %40 = arith.addf %35, %39 : vector<32x128xf32>
    %cst_45 = arith.constant 0.000000e+00 : f32
    %41 = vector.broadcast %cst_45 : f32 to vector<32x128xf32>
    %42 = arith.maximumf %40, %41 : vector<32x128xf32>
    %43 = vector.shape_cast %42 : vector<32x128xf32> to vector<2x16x128xf32>
    %44 = vector.broadcast %0 : vector<2x16x1xf32> to vector<2x16x128xf32>
    %45 = arith.mulf %43, %44 : vector<2x16x128xf32>
    %46 = arith.truncf %45 : vector<2x16x128xf32> to vector<2x16x128xbf16>
    %cst_46 = arith.constant 0.000000e+00 : bf16
    %47 = vector.broadcast %cst_46 : bf16 to vector<2x20x128xbf16>
    %c0_47 = arith.constant 0 : index
    %c0_48 = arith.constant 0 : index
    %c0_49 = arith.constant 0 : index
    %48 = vector.load %arg14[%c0_47, %c0_48, %c0_49] : memref<2x20x128xbf16, #tpu.memory_space<vmem>>, vector<2x20x128xbf16>
    tpu.vector_store %arg14[%c0_47, %c0_48, %c0_49], %47 {strides = array<i32>} : memref<2x20x128xbf16, #tpu.memory_space<vmem>>, vector<2x20x128xbf16>,
    %c0_50 = arith.constant 0 : index
    %c2_51 = arith.constant 2 : index
    %c0_52 = arith.constant 0 : index
    %49 = vector.load %arg14[%c0_50, %c2_51, %c0_52] : memref<2x20x128xbf16, #tpu.memory_space<vmem>>, vector<2x16x128xbf16>
    tpu.vector_store %arg14[%c0_50, %c2_51, %c0_52], %46 {strides = array<i32>} : memref<2x20x128xbf16, #tpu.memory_space<vmem>>, vector<2x16x128xbf16>,
    %cst_53 = arith.constant 0.000000e+00 : f32
    %50 = vector.broadcast %cst_53 : f32 to vector<32x128xf32>
    %c0_54 = arith.constant 0 : index
    %c0_55 = arith.constant 0 : index
    %c0_56 = arith.constant 0 : index
    %51 = vector.load %arg14[%c0_54, %c0_55, %c0_56] : memref<2x20x128xbf16, #tpu.memory_space<vmem>>, vector<2x16x128xbf16>
    %52 = vector.shape_cast %51 : vector<2x16x128xbf16> to vector<32x128xbf16>
    %c0_57 = arith.constant 0 : index
    %c0_58 = arith.constant 0 : index
    %c0_59 = arith.constant 0 : index
    %53 = vector.load %arg5[%c0_57, %c0_58, %c0_59] : memref<5x128x128xbf16, #tpu.memory_space<vmem>>, vector<1x128x128xbf16>
    %54 = vector.shape_cast %53 : vector<1x128x128xbf16> to vector<128x128xbf16>
    %cst_60 = arith.constant dense<0.000000e+00> : vector<32x128xf32>
    %55 = tpu.matmul %52, %54, %cst_60 {dimension_numbers = #tpu.dot_dimension_numbers<[1], [0], [0], [1], [0, 0, 1, 1], [], []>} : vector<32x128xbf16>, vector<128x128xbf16>, vector<32x128xf32> -> vector<32x128xf32>
    %56 = arith.addf %50, %55 : vector<32x128xf32>
    %c0_61 = arith.constant 0 : index
    %c1_62 = arith.constant 1 : index
    %c0_63 = arith.constant 0 : index
    %57 = vector.load %arg14[%c0_61, %c1_62, %c0_63] : memref<2x20x128xbf16, #tpu.memory_space<vmem>>, vector<2x16x128xbf16>
    %58 = vector.shape_cast %57 : vector<2x16x128xbf16> to vector<32x128xbf16>
    %c1_64 = arith.constant 1 : index
    %c0_65 = arith.constant 0 : index
    %c0_66 = arith.constant 0 : index
    %59 = vector.load %arg5[%c1_64, %c0_65, %c0_66] : memref<5x128x128xbf16, #tpu.memory_space<vmem>>, vector<1x128x128xbf16>
    %60 = vector.shape_cast %59 : vector<1x128x128xbf16> to vector<128x128xbf16>
    %cst_67 = arith.constant dense<0.000000e+00> : vector<32x128xf32>
    %61 = tpu.matmul %58, %60, %cst_67 {dimension_numbers = #tpu.dot_dimension_numbers<[1], [0], [0], [1], [0, 0, 1, 1], [], []>} : vector<32x128xbf16>, vector<128x128xbf16>, vector<32x128xf32> -> vector<32x128xf32>
    %62 = arith.addf %56, %61 : vector<32x128xf32>
    %c0_68 = arith.constant 0 : index
    %c2_69 = arith.constant 2 : index
    %c0_70 = arith.constant 0 : index
    %63 = vector.load %arg14[%c0_68, %c2_69, %c0_70] : memref<2x20x128xbf16, #tpu.memory_space<vmem>>, vector<2x16x128xbf16>
    %64 = vector.shape_cast %63 : vector<2x16x128xbf16> to vector<32x128xbf16>
    %c2_71 = arith.constant 2 : index
    %c0_72 = arith.constant 0 : index
    %c0_73 = arith.constant 0 : index
    %65 = vector.load %arg5[%c2_71, %c0_72, %c0_73] : memref<5x128x128xbf16, #tpu.memory_space<vmem>>, vector<1x128x128xbf16>
    %66 = vector.shape_cast %65 : vector<1x128x128xbf16> to vector<128x128xbf16>
    %cst_74 = arith.constant dense<0.000000e+00> : vector<32x128xf32>
    %67 = tpu.matmul %64, %66, %cst_74 {dimension_numbers = #tpu.dot_dimension_numbers<[1], [0], [0], [1], [0, 0, 1, 1], [], []>} : vector<32x128xbf16>, vector<128x128xbf16>, vector<32x128xf32> -> vector<32x128xf32>
    %68 = arith.addf %62, %67 : vector<32x128xf32>
    %c0_75 = arith.constant 0 : index
    %c3_76 = arith.constant 3 : index
    %c0_77 = arith.constant 0 : index
    %69 = vector.load %arg14[%c0_75, %c3_76, %c0_77] : memref<2x20x128xbf16, #tpu.memory_space<vmem>>, vector<2x16x128xbf16>
    %70 = vector.shape_cast %69 : vector<2x16x128xbf16> to vector<32x128xbf16>
    %c3_78 = arith.constant 3 : index
    %c0_79 = arith.constant 0 : index
    %c0_80 = arith.constant 0 : index
    %71 = vector.load %arg5[%c3_78, %c0_79, %c0_80] : memref<5x128x128xbf16, #tpu.memory_space<vmem>>, vector<1x128x128xbf16>
    %72 = vector.shape_cast %71 : vector<1x128x128xbf16> to vector<128x128xbf16>
    %cst_81 = arith.constant dense<0.000000e+00> : vector<32x128xf32>
    %73 = tpu.matmul %70, %72, %cst_81 {dimension_numbers = #tpu.dot_dimension_numbers<[1], [0], [0], [1], [0, 0, 1, 1], [], []>} : vector<32x128xbf16>, vector<128x128xbf16>, vector<32x128xf32> -> vector<32x128xf32>
    %74 = arith.addf %68, %73 : vector<32x128xf32>
    %c0_82 = arith.constant 0 : index
    %c4_83 = arith.constant 4 : index
    %c0_84 = arith.constant 0 : index
    %75 = vector.load %arg14[%c0_82, %c4_83, %c0_84] : memref<2x20x128xbf16, #tpu.memory_space<vmem>>, vector<2x16x128xbf16>
    %76 = vector.shape_cast %75 : vector<2x16x128xbf16> to vector<32x128xbf16>
    %c4_85 = arith.constant 4 : index
    %c0_86 = arith.constant 0 : index
    %c0_87 = arith.constant 0 : index
    %77 = vector.load %arg5[%c4_85, %c0_86, %c0_87] : memref<5x128x128xbf16, #tpu.memory_space<vmem>>, vector<1x128x128xbf16>
    %78 = vector.shape_cast %77 : vector<1x128x128xbf16> to vector<128x128xbf16>
    %cst_88 = arith.constant dense<0.000000e+00> : vector<32x128xf32>
    %79 = tpu.matmul %76, %78, %cst_88 {dimension_numbers = #tpu.dot_dimension_numbers<[1], [0], [0], [1], [0, 0, 1, 1], [], []>} : vector<32x128xbf16>, vector<128x128xbf16>, vector<32x128xf32> -> vector<32x128xf32>
    %80 = arith.addf %74, %79 : vector<32x128xf32>
    %c0_89 = arith.constant 0 : index
    %c0_90 = arith.constant 0 : index
    %81 = vector.load %arg6[%c0_89, %c0_90] : memref<1x128xf32, #tpu.memory_space<vmem>>, vector<1x128xf32>
    %82 = vector.shape_cast %81 : vector<1x128xf32> to vector<128xf32>
    %83 = vector.shape_cast %82 : vector<128xf32> to vector<1x128xf32>
    %84 = vector.broadcast %83 : vector<1x128xf32> to vector<32x128xf32>
    %85 = arith.addf %80, %84 : vector<32x128xf32>
    %cst_91 = arith.constant 0.000000e+00 : f32
    %86 = vector.broadcast %cst_91 : f32 to vector<32x128xf32>
    %87 = arith.maximumf %85, %86 : vector<32x128xf32>
    %88 = vector.shape_cast %87 : vector<32x128xf32> to vector<2x16x128xf32>
    %89 = vector.broadcast %0 : vector<2x16x1xf32> to vector<2x16x128xf32>
    %90 = arith.mulf %88, %89 : vector<2x16x128xf32>
    %91 = arith.truncf %90 : vector<2x16x128xf32> to vector<2x16x128xbf16>
    %92 = vector.shape_cast %91 : vector<2x16x128xbf16> to vector<32x128xbf16>
    %c0_92 = arith.constant 0 : index
    %c0_93 = arith.constant 0 : index
    %93 = vector.load %arg7[%c0_92, %c0_93] : memref<128x128xbf16, #tpu.memory_space<vmem>>, vector<128x128xbf16>
    %cst_94 = arith.constant dense<0.000000e+00> : vector<32x128xf32>
    %94 = tpu.matmul %92, %93, %cst_94 {dimension_numbers = #tpu.dot_dimension_numbers<[1], [0], [0], [1], [0, 0, 1, 1], [], []>} : vector<32x128xbf16>, vector<128x128xbf16>, vector<32x128xf32> -> vector<32x128xf32>
    %c0_95 = arith.constant 0 : index
    %c0_96 = arith.constant 0 : index
    %95 = vector.load %arg8[%c0_95, %c0_96] : memref<1x128xf32, #tpu.memory_space<vmem>>, vector<1x128xf32>
    %96 = vector.shape_cast %95 : vector<1x128xf32> to vector<128xf32>
    %97 = vector.shape_cast %96 : vector<128xf32> to vector<1x128xf32>
    %98 = vector.broadcast %97 : vector<1x128xf32> to vector<32x128xf32>
    %99 = arith.addf %94, %98 : vector<32x128xf32>
    %100 = arith.truncf %99 : vector<32x128xf32> to vector<32x128xbf16>
    %c0_97 = arith.constant 0 : index
    %c0_98 = arith.constant 0 : index
    %101 = vector.load %arg9[%c0_97, %c0_98] : memref<128x128xbf16, #tpu.memory_space<vmem>>, vector<128x128xbf16>
    %cst_99 = arith.constant dense<0.000000e+00> : vector<32x128xf32>
    %102 = tpu.matmul %100, %101, %cst_99 {dimension_numbers = #tpu.dot_dimension_numbers<[1], [0], [0], [1], [0, 0, 1, 1], [], []>} : vector<32x128xbf16>, vector<128x128xbf16>, vector<32x128xf32> -> vector<32x128xf32>
    %c0_100 = arith.constant 0 : index
    %c0_101 = arith.constant 0 : index
    %103 = vector.load %arg10[%c0_100, %c0_101] : memref<1x128xf32, #tpu.memory_space<vmem>>, vector<1x128xf32>
    %104 = vector.shape_cast %103 : vector<1x128xf32> to vector<128xf32>
    %105 = vector.shape_cast %104 : vector<128xf32> to vector<1x128xf32>
    %106 = vector.broadcast %105 : vector<1x128xf32> to vector<32x128xf32>
    %107 = arith.addf %102, %106 : vector<32x128xf32>
    %cst_102 = arith.constant 0.000000e+00 : f32
    %108 = vector.broadcast %cst_102 : f32 to vector<32x128xf32>
    %109 = arith.maximumf %107, %108 : vector<32x128xf32>
    %110 = arith.truncf %109 : vector<32x128xf32> to vector<32x128xbf16>
    %c0_103 = arith.constant 0 : index
    %c0_104 = arith.constant 0 : index
    %111 = vector.load %arg11[%c0_103, %c0_104] : memref<128x128xbf16, #tpu.memory_space<vmem>>, vector<128x128xbf16>
    %cst_105 = arith.constant dense<0.000000e+00> : vector<32x128xf32>
    %112 = tpu.matmul %110, %111, %cst_105 {dimension_numbers = #tpu.dot_dimension_numbers<[1], [0], [0], [1], [0, 0, 1, 1], [], []>} : vector<32x128xbf16>, vector<128x128xbf16>, vector<32x128xf32> -> vector<32x128xf32>
    %c0_106 = arith.constant 0 : index
    %c0_107 = arith.constant 0 : index
    %113 = vector.load %arg12[%c0_106, %c0_107] : memref<1x128xf32, #tpu.memory_space<vmem>>, vector<1x128xf32>
    %114 = vector.shape_cast %113 : vector<1x128xf32> to vector<128xf32>
    %115 = vector.shape_cast %114 : vector<128xf32> to vector<1x128xf32>
    %116 = vector.broadcast %115 : vector<1x128xf32> to vector<32x128xf32>
    %117 = arith.addf %112, %116 : vector<32x128xf32>
    %118 = vector.shape_cast %117 : vector<32x128xf32> to vector<2x16x128xf32>
    %c0_108 = arith.constant 0 : index
    %c0_109 = arith.constant 0 : index
    %c0_110 = arith.constant 0 : index
    %119 = vector.load %arg13[%c0_108, %c0_109, %c0_110] : memref<2x16x128xf32, #tpu.memory_space<vmem>>, vector<2x16x128xf32>
    tpu.vector_store %arg13[%c0_108, %c0_109, %c0_110], %118 {strides = array<i32>} : memref<2x16x128xf32, #tpu.memory_space<vmem>>, vector<2x16x128xf32>,
    return
  }
  func.func @transform_0(%arg0: i32) -> (i32, i32, i32) {
    %c0_i32 = arith.constant 0 : i32
    %c0_i32_0 = arith.constant 0 : i32
    %c0_i32_1 = arith.constant 0 : i32
    return %arg0, %c0_i32, %c0_i32_0 : i32, i32, i32
  }
  func.func @transform_1(%arg0: i32) -> (i32, i32, i32) {
    %c0_i32 = arith.constant 0 : i32
    %c0_i32_0 = arith.constant 0 : i32
    %c0_i32_1 = arith.constant 0 : i32
    return %arg0, %c0_i32, %c0_i32_0 : i32, i32, i32
  }
  func.func @transform_2(%arg0: i32) -> (i32, i32, i32) {
    %c0_i32 = arith.constant 0 : i32
    %c0_i32_0 = arith.constant 0 : i32
    %c0_i32_1 = arith.constant 0 : i32
    %c0_i32_2 = arith.constant 0 : i32
    return %c0_i32, %c0_i32_0, %c0_i32_1 : i32, i32, i32
  }
  func.func @transform_3(%arg0: i32) -> (i32, i32) {
    %c0_i32 = arith.constant 0 : i32
    %c0_i32_0 = arith.constant 0 : i32
    %c0_i32_1 = arith.constant 0 : i32
    return %c0_i32, %c0_i32_0 : i32, i32
  }
  func.func @transform_4(%arg0: i32) -> (i32, i32, i32) {
    %c0_i32 = arith.constant 0 : i32
    %c0_i32_0 = arith.constant 0 : i32
    %c0_i32_1 = arith.constant 0 : i32
    %c0_i32_2 = arith.constant 0 : i32
    return %c0_i32, %c0_i32_0, %c0_i32_1 : i32, i32, i32
  }
  func.func @transform_5(%arg0: i32) -> (i32, i32) {
    %c0_i32 = arith.constant 0 : i32
    %c0_i32_0 = arith.constant 0 : i32
    %c0_i32_1 = arith.constant 0 : i32
    return %c0_i32, %c0_i32_0 : i32, i32
  }
  func.func @transform_6(%arg0: i32) -> (i32, i32) {
    %c0_i32 = arith.constant 0 : i32
    %c0_i32_0 = arith.constant 0 : i32
    %c0_i32_1 = arith.constant 0 : i32
    return %c0_i32, %c0_i32_0 : i32, i32
  }
  func.func @transform_7(%arg0: i32) -> (i32, i32) {
    %c0_i32 = arith.constant 0 : i32
    %c0_i32_0 = arith.constant 0 : i32
    %c0_i32_1 = arith.constant 0 : i32
    return %c0_i32, %c0_i32_0 : i32, i32
  }
  func.func @transform_8(%arg0: i32) -> (i32, i32) {
    %c0_i32 = arith.constant 0 : i32
    %c0_i32_0 = arith.constant 0 : i32
    %c0_i32_1 = arith.constant 0 : i32
    return %c0_i32, %c0_i32_0 : i32, i32
  }
  func.func @transform_9(%arg0: i32) -> (i32, i32) {
    %c0_i32 = arith.constant 0 : i32
    %c0_i32_0 = arith.constant 0 : i32
    %c0_i32_1 = arith.constant 0 : i32
    return %c0_i32, %c0_i32_0 : i32, i32
  }
  func.func @transform_10(%arg0: i32) -> (i32, i32) {
    %c0_i32 = arith.constant 0 : i32
    %c0_i32_0 = arith.constant 0 : i32
    %c0_i32_1 = arith.constant 0 : i32
    return %c0_i32, %c0_i32_0 : i32, i32
  }
  func.func @transform_11(%arg0: i32) -> (i32, i32) {
    %c0_i32 = arith.constant 0 : i32
    %c0_i32_0 = arith.constant 0 : i32
    %c0_i32_1 = arith.constant 0 : i32
    return %c0_i32, %c0_i32_0 : i32, i32
  }
  func.func @transform_12(%arg0: i32) -> (i32, i32, i32) {
    %c0_i32 = arith.constant 0 : i32
    %c0_i32_0 = arith.constant 0 : i32
    %c0_i32_1 = arith.constant 0 : i32
    return %arg0, %c0_i32, %c0_i32_0 : i32, i32, i32
  }
}

</mosaic_0001>

<llo_original>
// kernel: dna_classifier_forward.1
$region0: #{dna_classifier_forward.1}
  #allocation0 [shape = 'u32[]', space=smem, size = 0x4, offset = 0x4, fixed_abs, tag = 'smem constant byte address 0x4 - core index']
  #allocation1 [shape = 'u32[144,128]{1,0:T(1,128)}', space=vmem, size = 0x12000, scoped, tag = 'internal scratch']
  #allocation2 [shape = 'bf16[2,20,128]{2,1,0:T(8,128)(2,1)}', space=vmem, size = 0x3000, scoped, tag = 'scratch operand']
  %s0 = inlined_call_operand.vmem [shape: bf16[4,16,128], index: 0, kind: input, shape index: {}]
  %s1 = inlined_call_operand.vmem [shape: f32[4,16,1], index: 1, kind: input, shape index: {}]
  %s2 = inlined_call_operand.vmem [shape: bf16[5,128,128], index: 2, kind: input, shape index: {}]
  %s3 = inlined_call_operand.vmem [shape: f32[1,128], index: 3, kind: input, shape index: {}]
  %s4 = inlined_call_operand.vmem [shape: bf16[5,128,128], index: 4, kind: input, shape index: {}]
  %s5 = inlined_call_operand.vmem [shape: f32[1,128], index: 5, kind: input, shape index: {}]
  %s6 = inlined_call_operand.vmem [shape: bf16[128,128], index: 6, kind: input, shape index: {}]
  %s7 = inlined_call_operand.vmem [shape: f32[1,128], index: 7, kind: input, shape index: {}]
  %s8 = inlined_call_operand.vmem [shape: bf16[128,128], index: 8, kind: input, shape index: {}]
  %s9 = inlined_call_operand.vmem [shape: f32[1,128], index: 9, kind: input, shape index: {}]
  %s10 = inlined_call_operand.vmem [shape: bf16[128,128], index: 10, kind: input, shape index: {}]
  %s11 = inlined_call_operand.vmem [shape: f32[1,128], index: 11, kind: input, shape index: {}]
  %s12 = inlined_call_operand.vmem [shape: f32[4,16,128], index: 12, kind: output, shape index: {}]
  %s13 = sld [smem:[#allocation0]]
  $region81: #{dna_classifier_forward.1} parent=0
    _
  %s15 = ssub.s32 1, %s13
  %s16 = scalar_select 0, %s15, %s13
  loop: start=0, step=1, limit=4
  $region2: #{dna_classifier_forward.1} parent=0 // loop_pre_header
    _
  $region3: #{dna_classifier_forward.1} parent=0 // loop_header
    %s18 = sphi 0, %s22
    %p19 = scmp.ge.s32.totalorder %s18, 4
    %s28 = sphi 0, %s30
    %s31 = sphi 0, %s28
    %s32 = sphi 0, %s31
    %s48 = sphi 0, %s32
    %s54 = sphi 0, %s56
    %s57 = sphi 0, %s54
    %s58 = sphi 0, %s57
    %s74 = sphi 0, %s58
    %s78 = sphi 0, %s78
    %s80 = sphi 0, %s78
    %s81 = sphi 0, %s80
    %s95 = sphi 0, %s81
    %s99 = sphi 0, %s99
    %s101 = sphi 0, %s99
    %s102 = sphi 0, %s101
    %s116 = sphi 0, %s102
    %s120 = sphi 0, %s120
    %s122 = sphi 0, %s120
    %s123 = sphi 0, %s122
    %s137 = sphi 0, %s123
    %s141 = sphi 0, %s141
    %s143 = sphi 0, %s141
    %s144 = sphi 0, %s143
    %s158 = sphi 0, %s144
    %s162 = sphi 0, %s162
    %s164 = sphi 0, %s162
    %s165 = sphi 0, %s164
    %s179 = sphi 0, %s165
    %s183 = sphi 0, %s183
    %s185 = sphi 0, %s183
    %s186 = sphi 0, %s185
    %s200 = sphi 0, %s186
    %s204 = sphi 0, %s204
    %s206 = sphi 0, %s204
    %s207 = sphi 0, %s206
    %s221 = sphi 0, %s207
    %s225 = sphi 0, %s225
    %s227 = sphi 0, %s225
    %s228 = sphi 0, %s227
    %s242 = sphi 0, %s228
    %s246 = sphi 0, %s246
    %s248 = sphi 0, %s246
    %s249 = sphi 0, %s248
    %s263 = sphi 0, %s249
    %s267 = sphi 0, %s267
    %s269 = sphi 0, %s267
    %s270 = sphi 0, %s269
    %s284 = sphi 0, %s270
    %s290 = sphi 0, %s292
    %s293 = sphi 0, %s290
    %s294 = sphi 0, %s293
    %s310 = sphi 0, %s294
  $region4: #{dna_classifier_forward.1} parent=0 // loop_header_branch
    %21 = sbr.rel (%p19) target = $region8
  $region5: #{dna_classifier_forward.1} parent=0 // loop_body
    %s23 = ssub.s32 %s18, 1
    %s24 = ssub.s32 %s18, 2
    %s25 = sadd.s32 %s18, 1
    %s26 = ssub.s32 %s18, %s25
    %p27 = scmp.eq.s32.totalorder %s26, 0
    %s29 = sadd.s32 %s28, 1
    %s30 = scalar_select %p27, %s28, %s29
    %p33 = pneg %p27
    %p34 = scmp.eq.s32.totalorder %s18, 1
    %p35 = por %p33, %p34
    %p36 = scmp.ne.s32.totalorder %s28, %s31
    %p37 = scmp.eq.s32.totalorder %s18, 0
    %p38 = por %p36, %p37
    %p39 = scmp.ne.s32.totalorder %s28, %s31
    %p40 = scmp.eq.s32.totalorder %s23, 1
    %p41 = por %p39, %p40
    %p42 = scmp.ne.s32.totalorder %s31, %s32
    %p43 = scmp.eq.s32.totalorder %s23, 0
    %p44 = por %p42, %p43
    %p45 = scmp.ne.s32.totalorder %s31, %s32
    %p46 = scmp.eq.s32.totalorder %s24, 1
    %p47 = por %p45, %p46
    %p49 = scmp.ne.s32.totalorder %s32, %s48
    %p50 = scmp.eq.s32.totalorder %s24, 0
    %p51 = por %p49, %p50
    %s52 = ssub.s32 %s18, %s25
    %p53 = scmp.eq.s32.totalorder %s52, 0
    %s55 = sadd.s32 %s54, 1
    %s56 = scalar_select %p53, %s54, %s55
    %p59 = pneg %p53
    %p60 = scmp.eq.s32.totalorder %s18, 1
    %p61 = por %p59, %p60
    %p62 = scmp.ne.s32.totalorder %s54, %s57
    %p63 = scmp.eq.s32.totalorder %s18, 0
    %p64 = por %p62, %p63
    %p65 = scmp.ne.s32.totalorder %s54, %s57
    %p66 = scmp.eq.s32.totalorder %s23, 1
    %p67 = por %p65, %p66
    %p68 = scmp.ne.s32.totalorder %s57, %s58
    %p69 = scmp.eq.s32.totalorder %s23, 0
    %p70 = por %p68, %p69
    %p71 = scmp.ne.s32.totalorder %s57, %s58
    %p72 = scmp.eq.s32.totalorder %s24, 1
    %p73 = por %p71, %p72
    %p75 = scmp.ne.s32.totalorder %s58, %s74
    %p76 = scmp.eq.s32.totalorder %s24, 0
    %p77 = por %p75, %p76
    %s79 = sadd.s32 %s78, 1
    %p82 = scmp.eq.s32.totalorder %s18, 1
    %p83 = scmp.ne.s32.totalorder %s78, %s80
    %p84 = scmp.eq.s32.totalorder %s18, 0
    %p85 = por %p83, %p84
    %p86 = scmp.ne.s32.totalorder %s78, %s80
    %p87 = scmp.eq.s32.totalorder %s23, 1
    %p88 = por %p86, %p87
    %p89 = scmp.ne.s32.totalorder %s80, %s81
    %p90 = scmp.eq.s32.totalorder %s23, 0
    %p91 = por %p89, %p90
    %p92 = scmp.ne.s32.totalorder %s80, %s81
    %p93 = scmp.eq.s32.totalorder %s24, 1
    %p94 = por %p92, %p93
    %p96 = scmp.ne.s32.totalorder %s81, %s95
    %p97 = scmp.eq.s32.totalorder %s24, 0
    %p98 = por %p96, %p97
    %s100 = sadd.s32 %s99, 1
    %p103 = scmp.eq.s32.totalorder %s18, 1
    %p104 = scmp.ne.s32.totalorder %s99, %s101
    %p105 = scmp.eq.s32.totalorder %s18, 0
    %p106 = por %p104, %p105
    %p107 = scmp.ne.s32.totalorder %s99, %s101
    %p108 = scmp.eq.s32.totalorder %s23, 1
    %p109 = por %p107, %p108
    %p110 = scmp.ne.s32.totalorder %s101, %s102
    %p111 = scmp.eq.s32.totalorder %s23, 0
    %p112 = por %p110, %p111
    %p113 = scmp.ne.s32.totalorder %s101, %s102
    %p114 = scmp.eq.s32.totalorder %s24, 1
    %p115 = por %p113, %p114
    %p117 = scmp.ne.s32.totalorder %s102, %s116
    %p118 = scmp.eq.s32.totalorder %s24, 0
    %p119 = por %p117, %p118
    %s121 = sadd.s32 %s120, 1
    %p124 = scmp.eq.s32.totalorder %s18, 1
    %p125 = scmp.ne.s32.totalorder %s120, %s122
    %p126 = scmp.eq.s32.totalorder %s18, 0
    %p127 = por %p125, %p126
    %p128 = scmp.ne.s32.totalorder %s120, %s122
    %p129 = scmp.eq.s32.totalorder %s23, 1
    %p130 = por %p128, %p129
    %p131 = scmp.ne.s32.totalorder %s122, %s123
    %p132 = scmp.eq.s32.totalorder %s23, 0
    %p133 = por %p131, %p132
    %p134 = scmp.ne.s32.totalorder %s122, %s123
    %p135 = scmp.eq.s32.totalorder %s24, 1
    %p136 = por %p134, %p135
    %p138 = scmp.ne.s32.totalorder %s123, %s137
    %p139 = scmp.eq.s32.totalorder %s24, 0
    %p140 = por %p138, %p139
    %s142 = sadd.s32 %s141, 1
    %p145 = scmp.eq.s32.totalorder %s18, 1
    %p146 = scmp.ne.s32.totalorder %s141, %s143
    %p147 = scmp.eq.s32.totalorder %s18, 0
    %p148 = por %p146, %p147
    %p149 = scmp.ne.s32.totalorder %s141, %s143
    %p150 = scmp.eq.s32.totalorder %s23, 1
    %p151 = por %p149, %p150
    %p152 = scmp.ne.s32.totalorder %s143, %s144
    %p153 = scmp.eq.s32.totalorder %s23, 0
    %p154 = por %p152, %p153
    %p155 = scmp.ne.s32.totalorder %s143, %s144
    %p156 = scmp.eq.s32.totalorder %s24, 1
    %p157 = por %p155, %p156
    %p159 = scmp.ne.s32.totalorder %s144, %s158
    %p160 = scmp.eq.s32.totalorder %s24, 0
    %p161 = por %p159, %p160
    %s163 = sadd.s32 %s162, 1
    %p166 = scmp.eq.s32.totalorder %s18, 1
    %p167 = scmp.ne.s32.totalorder %s162, %s164
    %p168 = scmp.eq.s32.totalorder %s18, 0
    %p169 = por %p167, %p168
    %p170 = scmp.ne.s32.totalorder %s162, %s164
    %p171 = scmp.eq.s32.totalorder %s23, 1
    %p172 = por %p170, %p171
    %p173 = scmp.ne.s32.totalorder %s164, %s165
    %p174 = scmp.eq.s32.totalorder %s23, 0
    %p175 = por %p173, %p174
    %p176 = scmp.ne.s32.totalorder %s164, %s165
    %p177 = scmp.eq.s32.totalorder %s24, 1
    %p178 = por %p176, %p177
    %p180 = scmp.ne.s32.totalorder %s165, %s179
    %p181 = scmp.eq.s32.totalorder %s24, 0
    %p182 = por %p180, %p181
    %s184 = sadd.s32 %s183, 1
    %p187 = scmp.eq.s32.totalorder %s18, 1
    %p188 = scmp.ne.s32.totalorder %s183, %s185
    %p189 = scmp.eq.s32.totalorder %s18, 0
    %p190 = por %p188, %p189
    %p191 = scmp.ne.s32.totalorder %s183, %s185
    %p192 = scmp.eq.s32.totalorder %s23, 1
    %p193 = por %p191, %p192
    %p194 = scmp.ne.s32.totalorder %s185, %s186
    %p195 = scmp.eq.s32.totalorder %s23, 0
    %p196 = por %p194, %p195
    %p197 = scmp.ne.s32.totalorder %s185, %s186
    %p198 = scmp.eq.s32.totalorder %s24, 1
    %p199 = por %p197, %p198
    %p201 = scmp.ne.s32.totalorder %s186, %s200
    %p202 = scmp.eq.s32.totalorder %s24, 0
    %p203 = por %p201, %p202
    %s205 = sadd.s32 %s204, 1
    %p208 = scmp.eq.s32.totalorder %s18, 1
    %p209 = scmp.ne.s32.totalorder %s204, %s206
    %p210 = scmp.eq.s32.totalorder %s18, 0
    %p211 = por %p209, %p210
    %p212 = scmp.ne.s32.totalorder %s204, %s206
    %p213 = scmp.eq.s32.totalorder %s23, 1
    %p214 = por %p212, %p213
    %p215 = scmp.ne.s32.totalorder %s206, %s207
    %p216 = scmp.eq.s32.totalorder %s23, 0
    %p217 = por %p215, %p216
    %p218 = scmp.ne.s32.totalorder %s206, %s207
    %p219 = scmp.eq.s32.totalorder %s24, 1
    %p220 = por %p218, %p219
    %p222 = scmp.ne.s32.totalorder %s207, %s221
    %p223 = scmp.eq.s32.totalorder %s24, 0
    %p224 = por %p222, %p223
    %s226 = sadd.s32 %s225, 1
    %p229 = scmp.eq.s32.totalorder %s18, 1
    %p230 = scmp.ne.s32.totalorder %s225, %s227
    %p231 = scmp.eq.s32.totalorder %s18, 0
    %p232 = por %p230, %p231
    %p233 = scmp.ne.s32.totalorder %s225, %s227
    %p234 = scmp.eq.s32.totalorder %s23, 1
    %p235 = por %p233, %p234
    %p236 = scmp.ne.s32.totalorder %s227, %s228
    %p237 = scmp.eq.s32.totalorder %s23, 0
    %p238 = por %p236, %p237
    %p239 = scmp.ne.s32.totalorder %s227, %s228
    %p240 = scmp.eq.s32.totalorder %s24, 1
    %p241 = por %p239, %p240
    %p243 = scmp.ne.s32.totalorder %s228, %s242
    %p244 = scmp.eq.s32.totalorder %s24, 0
    %p245 = por %p243, %p244
    %s247 = sadd.s32 %s246, 1
    %p250 = scmp.eq.s32.totalorder %s18, 1
    %p251 = scmp.ne.s32.totalorder %s246, %s248
    %p252 = scmp.eq.s32.totalorder %s18, 0
    %p253 = por %p251, %p252
    %p254 = scmp.ne.s32.totalorder %s246, %s248
    %p255 = scmp.eq.s32.totalorder %s23, 1
    %p256 = por %p254, %p255
    %p257 = scmp.ne.s32.totalorder %s248, %s249
    %p258 = scmp.eq.s32.totalorder %s23, 0
    %p259 = por %p257, %p258
    %p260 = scmp.ne.s32.totalorder %s248, %s249
    %p261 = scmp.eq.s32.totalorder %s24, 1
    %p262 = por %p260, %p261
    %p264 = scmp.ne.s32.totalorder %s249, %s263
    %p265 = scmp.eq.s32.totalorder %s24, 0
    %p266 = por %p264, %p265
    %s268 = sadd.s32 %s267, 1
    %p271 = scmp.eq.s32.totalorder %s18, 1
    %p272 = scmp.ne.s32.totalorder %s267, %s269
    %p273 = scmp.eq.s32.totalorder %s18, 0
    %p274 = por %p272, %p273
    %p275 = scmp.ne.s32.totalorder %s267, %s269
    %p276 = scmp.eq.s32.totalorder %s23, 1
    %p277 = por %p275, %p276
    %p278 = scmp.ne.s32.totalorder %s269, %s270
    %p279 = scmp.eq.s32.totalorder %s23, 0
    %p280 = por %p278, %p279
    %p281 = scmp.ne.s32.totalorder %s269, %s270
    %p282 = scmp.eq.s32.totalorder %s24, 1
    %p283 = por %p281, %p282
    %p285 = scmp.ne.s32.totalorder %s270, %s284
    %p286 = scmp.eq.s32.totalorder %s24, 0
    %p287 = por %p285, %p286
    %s288 = ssub.s32 %s18, %s25
    %p289 = scmp.eq.s32.totalorder %s288, 0
    %s291 = sadd.s32 %s290, 1
    %s292 = scalar_select %p289, %s290, %s291
    %p295 = pneg %p289
    %p296 = scmp.eq.s32.totalorder %s18, 1
    %p297 = por %p295, %p296
    %p298 = scmp.ne.s32.totalorder %s290, %s293
    %p299 = scmp.eq.s32.totalorder %s18, 0
    %p300 = por %p298, %p299
    %p301 = scmp.ne.s32.totalorder %s290, %s293
    %p302 = scmp.eq.s32.totalorder %s23, 1
    %p303 = por %p301, %p302
    %p304 = scmp.ne.s32.totalorder %s293, %s294
    %p305 = scmp.eq.s32.totalorder %s23, 0
    %p306 = por %p304, %p305
    %p307 = scmp.ne.s32.totalorder %s293, %s294
    %p308 = scmp.eq.s32.totalorder %s24, 1
    %p309 = por %p307, %p308
    %p311 = scmp.ne.s32.totalorder %s294, %s310
    %p312 = scmp.eq.s32.totalorder %s24, 0
    %p313 = por %p311, %p312
    %p314 = scmp.le.s32.totalorder 1, %s18
    %p315 = scmp.lt.s32.totalorder %s18, 3
    %p316 = pnand %p314, %p315
    %p317 = pneg %p316
    // Predicated region
    $region9: #{dna_classifier_forward.1} parent=5 // pred_check
      _
    $region10: #{dna_classifier_forward.1} parent=5 // pred_check_branch
      %319 = sbr.rel (%p316) target = $region12
    $region11: #{dna_classifier_forward.1} parent=5 // pred_region
      %s320 = ssub.s32 %s18, 1
      // Predicated region
      $region13: #{dna_classifier_forward.1} parent=11 // pred_check
        %p321 = pneg %p91
      $region14: #{dna_classifier_forward.1} parent=11 // pred_check_branch
        %323 = sbr.rel (%p321) target = $region16
      $region15: #{dna_classifier_forward.1} parent=11 // pred_region
        _
      $region16: #{dna_classifier_forward.1} parent=11 // pred_fallthru
        _
      // Predicated region
      $region17: #{dna_classifier_forward.1} parent=11 // pred_check
        %p324 = pneg %p112
      $region18: #{dna_classifier_forward.1} parent=11 // pred_check_branch
        %326 = sbr.rel (%p324) target = $region20
      $region19: #{dna_classifier_forward.1} parent=11 // pred_region
        _
      $region20: #{dna_classifier_forward.1} parent=11 // pred_fallthru
        _
      // Predicated region
      $region21: #{dna_classifier_forward.1} parent=11 // pred_check
        %p327 = pneg %p133
      $region22: #{dna_classifier_forward.1} parent=11 // pred_check_branch
        %329 = sbr.rel (%p327) target = $region24
      $region23: #{dna_classifier_forward.1} parent=11 // pred_region
        _
      $region24: #{dna_classifier_forward.1} parent=11 // pred_fallthru
        _
      // Predicated region
      $region25: #{dna_classifier_forward.1} parent=11 // pred_check
        %p330 = pneg %p154
      $region26: #{dna_classifier_forward.1} parent=11 // pred_check_branch
        %332 = sbr.rel (%p330) target = $region28
      $region27: #{dna_classifier_forward.1} parent=11 // pred_region
        _
      $region28: #{dna_classifier_forward.1} parent=11 // pred_fallthru
        _
      // Predicated region
      $region29: #{dna_classifier_forward.1} parent=11 // pred_check
        %p333 = pneg %p175
      $region30: #{dna_classifier_forward.1} parent=11 // pred_check_branch
        %335 = sbr.rel (%p333) target = $region32
      $region31: #{dna_classifier_forward.1} parent=11 // pred_region
        _
      $region32: #{dna_classifier_forward.1} parent=11 // pred_fallthru
        _
      // Predicated region
      $region33: #{dna_classifier_forward.1} parent=11 // pred_check
        %p336 = pneg %p196
      $region34: #{dna_classifier_forward.1} parent=11 // pred_check_branch
        %338 = sbr.rel (%p336) target = $region36
      $region35: #{dna_classifier_forward.1} parent=11 // pred_region
        _
      $region36: #{dna_classifier_forward.1} parent=11 // pred_fallthru
        _
      // Predicated region
      $region37: #{dna_classifier_forward.1} parent=11 // pred_check
        %p339 = pneg %p217
      $region38: #{dna_classifier_forward.1} parent=11 // pred_check_branch
        %341 = sbr.rel (%p339) target = $region40
      $region39: #{dna_classifier_forward.1} parent=11 // pred_region
        _
      $region40: #{dna_classifier_forward.1} parent=11 // pred_fallthru
        _
      // Predicated region
      $region41: #{dna_classifier_forward.1} parent=11 // pred_check
        %p342 = pneg %p238
      $region42: #{dna_classifier_forward.1} parent=11 // pred_check_branch
        %344 = sbr.rel (%p342) target = $region44
      $region43: #{dna_classifier_forward.1} parent=11 // pred_region
        _
      $region44: #{dna_classifier_forward.1} parent=11 // pred_fallthru
        _
      // Predicated region
      $region45: #{dna_classifier_forward.1} parent=11 // pred_check
        %p345 = pneg %p259
      $region46: #{dna_classifier_forward.1} parent=11 // pred_check_branch
        %347 = sbr.rel (%p345) target = $region48
      $region47: #{dna_classifier_forward.1} parent=11 // pred_region
        _
      $region48: #{dna_classifier_forward.1} parent=11 // pred_fallthru
        _
      // Predicated region
      $region49: #{dna_classifier_forward.1} parent=11 // pred_check
        %p348 = pneg %p280
      $region50: #{dna_classifier_forward.1} parent=11 // pred_check_branch
        %350 = sbr.rel (%p348) target = $region52
      $region51: #{dna_classifier_forward.1} parent=11 // pred_region
        _
      $region52: #{dna_classifier_forward.1} parent=11 // pred_fallthru
        _
    $region12: #{dna_classifier_forward.1} parent=5 // pred_fallthru
      _
    %p351 = scmp.lt.s32.totalorder %s18, 2
    // Predicated region
    $region53: #{dna_classifier_forward.1} parent=5 // pred_check
      %p352 = pneg %p351
    $region54: #{dna_classifier_forward.1} parent=5 // pred_check_branch
      %354 = sbr.rel (%p352) target = $region56
    $region55: #{dna_classifier_forward.1} parent=5 // pred_region
      // Predicated region
      $region57: #{dna_classifier_forward.1} parent=55 // pred_check
        %p355 = pneg %p38
      $region58: #{dna_classifier_forward.1} parent=55 // pred_check_branch
        %357 = sbr.rel (%p355) target = $region60
      $region59: #{dna_classifier_forward.1} parent=55 // pred_region
        %s358 = smul.u32 2, %s18
        %p359 = scmp.lt.s32.totalorder %s358, 3
        %s360 = scalar_select %p359, %s358, 3
        %s361 = smul.addr %s360, 2
        %s362 = smul.addr %s361, 4
        %s363 = scalar_lea.vmem %s0, %s362
        %s364 = smul.u32 2, %s18
      $region60: #{dna_classifier_forward.1} parent=55 // pred_fallthru
        _
      // Predicated region
      $region61: #{dna_classifier_forward.1} parent=55 // pred_check
        %p365 = pneg %p64
      $region62: #{dna_classifier_forward.1} parent=55 // pred_check_branch
        %367 = sbr.rel (%p365) target = $region64
      $region63: #{dna_classifier_forward.1} parent=55 // pred_region
        %s368 = smul.u32 2, %s18
        %p369 = scmp.lt.s32.totalorder %s368, 3
        %s370 = scalar_select %p369, %s368, 3
        %s371 = smul.addr %s370, 2
        %s372 = smul.addr %s371, 8
        %s373 = scalar_lea.vmem %s1, %s372
        %s374 = smul.u32 2, %s18
      $region64: #{dna_classifier_forward.1} parent=55 // pred_fallthru
        _
    $region56: #{dna_classifier_forward.1} parent=5 // pred_fallthru
      _
    %p375 = scmp.le.s32.totalorder 1, %s18
    %p376 = scmp.lt.s32.totalorder %s18, 3
    %p377 = pnand %p375, %p376
    %p378 = pneg %p377
    // Predicated region
    $region65: #{dna_classifier_forward.1} parent=5 // pred_check
      _
    $region66: #{dna_classifier_forward.1} parent=5 // pred_check_branch
      %380 = sbr.rel (%p377) target = $region68
    $region67: #{dna_classifier_forward.1} parent=5 // pred_region
      %s381 = ssub.s32 %s18, 1
      %s382 = smul.u32 2, %s23
      %p383 = scmp.lt.s32.totalorder %s382, 3
      %s384 = scalar_select %p383, %s382, 3
      %s385 = smul.addr %s384, 2
      %s386 = smul.addr %s385, 4
      %s387 = scalar_lea.vmem %s0, %s386
      %p388 = pneg %p44
      %p389 = pneg %p41
      %s390 = smul.u32 2, %s23
      %p391 = scmp.lt.s32.totalorder %s390, 3
      %s392 = scalar_select %p391, %s390, 3
      %s393 = smul.addr %s392, 2
      %s394 = smul.addr %s393, 8
      %s395 = scalar_lea.vmem %s1, %s394
      %p396 = pneg %p70
      %p397 = pneg %p67
      %p398 = pneg %p91
      %p399 = pneg %p88
      %p400 = pneg %p112
      %p401 = pneg %p109
      %p402 = pneg %p133
      %p403 = pneg %p130
      %p404 = pneg %p154
      %p405 = pneg %p151
      %p406 = pneg %p175
      %p407 = pneg %p172
      %p408 = pneg %p196
      %p409 = pneg %p193
      %p410 = pneg %p217
      %p411 = pneg %p214
      %p412 = pneg %p238
      %p413 = pneg %p235
      %p414 = pneg %p259
      %p415 = pneg %p256
      %p416 = pneg %p280
      %p417 = pneg %p277
      %p418 = pneg %p306
      %p419 = pneg %p303
      %s420 = smul.u32 2, %s23
      %p421 = scmp.lt.s32.totalorder %s420, 3
      %s422 = scalar_select %p421, %s420, 3
      %s423 = smul.addr %s422, 2
      %s424 = smul.addr %s423, 8
      %s425 = scalar_lea.vmem %s12, %s424
      %s426 = smul.u32 2, %s23
      %p427 = scmp.lt.s32.totalorder %s426, 3
      %s428 = scalar_select %p427, %s426, 3
      %s429 = smul.addr %s428, 2
      %s430 = smul.addr %s429, 4
      %s431 = scalar_lea.vmem %s0, %s430
      %s432 = smul.u32 2, %s23
      %s433 = smul.u32 2, %s23
      %p434 = scmp.lt.s32.totalorder %s433, 3
      %s435 = scalar_select %p434, %s433, 3
      %s436 = smul.addr %s435, 2
      %s437 = smul.addr %s436, 8
      %s438 = scalar_lea.vmem %s1, %s437
      %s439 = smul.u32 2, %s23
      %s440 = smul.u32 2, %s23
      %p441 = scmp.lt.s32.totalorder %s440, 3
      %s442 = scalar_select %p441, %s440, 3
      %s443 = smul.addr %s442, 2
      %s444 = smul.addr %s443, 8
      %s445 = scalar_lea.vmem %s12, %s444
      %s446 = smul.u32 2, %s23
      %v448 = vld [vmem:[%s438] sm:$0xff]
      %v449 = vld [vmem:[%s438 + $0x8] sm:$0xff]
      %v450 = vld [vmem:[%s438 + $0x10] sm:$0xff]
      %v451 = vld [vmem:[%s438 + $0x18] sm:$0xff]
      %v452 = vld [vmem:[%s431] sm:$0xf]
      %v453 = vld [vmem:[%s431 + $0x4] sm:$0xf]
      %v454 = vld [vmem:[%s431 + $0x8] sm:$0xf]
      %v455 = vld [vmem:[%s431 + $0xc] sm:$0xf]
      %456 = vst [vmem:[#allocation2] sm:$0xf] 0
      %457 = vst [vmem:[#allocation2 + $0x4] sm:$0xf] 0
      %458 = vst [vmem:[#allocation2 + $0x8] sm:$0x3] 0
      %459 = vst [vmem:[#allocation2 + $0xc] sm:$0xf] 0
      %460 = vst [vmem:[#allocation2 + $0x10] sm:$0xf] 0
      %461 = vst [vmem:[#allocation2 + $0x14] sm:$0x3] 0
      %vm466 = vcmask 1040384
      %vm467 = vcmask 1044484
      %vm468 = vmor %vm466, %vm467
      %v469 = vrot.slane %v452, 7
      %v470 = vrot.slane %v469, 4
      %v471 = vrot.slane %v453, 7
      %v472 = vsel %vm468, %v470, %v471
      %v473 = vrot.slane %v471, 4
      %v474 = vrot.slane %v454, 7
      %v475 = vrot.slane %v474, 4
      %v476 = vrot.slane %v455, 7
      %v477 = vsel %vm468, %v475, %v476
      %v478 = vrot.slane %v476, 4
      %485 = vst [vmem:[#allocation2] sm:$0xe] %v469
      %486 = vst [vmem:[#allocation2 + $0x4] sm:$0xf] %v472
      %487 = vst [vmem:[#allocation2 + $0x8] sm:$0x1] %v473
      %488 = vst [vmem:[#allocation2 + $0xc] sm:$0xe] %v474
      %489 = vst [vmem:[#allocation2 + $0x10] sm:$0xf] %v477
      %490 = vst [vmem:[#allocation2 + $0x14] sm:$0x1] %v478
      %v491 = vld [vmem:[#allocation2] sm:$0xf]
      %v492 = vld [vmem:[#allocation2 + $0x4] sm:$0xf]
      %v493 = vld [vmem:[#allocation2 + $0xc] sm:$0xf]
      %v494 = vld [vmem:[#allocation2 + $0x10] sm:$0xf]
      %v495 = vld [vmem:[%s2] sm:$0xf]
      %v496 = vld [vmem:[%s2 + $0x4] sm:$0xf]
      %v497 = vld [vmem:[%s2 + $0x8] sm:$0xf]
      %v498 = vld [vmem:[%s2 + $0xc] sm:$0xf]
      %v499 = vld [vmem:[%s2 + $0x10] sm:$0xf]
      %v500 = vld [vmem:[%s2 + $0x14] sm:$0xf]
      %v501 = vld [vmem:[%s2 + $0x18] sm:$0xf]
      %v502 = vld [vmem:[%s2 + $0x1c] sm:$0xf]
      %v503 = vld [vmem:[%s2 + $0x20] sm:$0xf]
      %v504 = vld [vmem:[%s2 + $0x24] sm:$0xf]
      %v505 = vld [vmem:[%s2 + $0x28] sm:$0xf]
      %v506 = vld [vmem:[%s2 + $0x2c] sm:$0xf]
      %v507 = vld [vmem:[%s2 + $0x30] sm:$0xf]
      %v508 = vld [vmem:[%s2 + $0x34] sm:$0xf]
      %v509 = vld [vmem:[%s2 + $0x38] sm:$0xf]
      %v510 = vld [vmem:[%s2 + $0x3c] sm:$0xf]
      %v511 = vld [vmem:[#allocation2 + $0x8] sm:$0x1]
      %v512 = vld [vmem:[#allocation2 + $0x14] sm:$0x1]
      %vm513 = vsmask.f32 3328
      %vm514 = vsmask.f32 7440
      %vm515 = vmor %vm513, %vm514
      %v517 = vshrl.u32 %v491, 16
      %v519 = vrot.slane %v517, 4
      %v520 = vshll.u32 %v491, 16
      %v522 = vrot.slane %v520, 5
      %v523 = vor.u32 %v519, %v522
      %v524 = vrot.slane %v523, 4
      %v526 = vshll.u32 %v492, 16
      %v528 = vrot.slane %v526, 5
      %v529 = vsel %vm515, %v524, %v528
      %v530 = vshrl.u32 %v492, 16
      %v532 = vrot.slane %v530, 4
      %v533 = vor.u32 %v532, %v528
      %v534 = vrot.slane %v533, 4
      %v536 = vshll.u32 %v511, 16
      %v538 = vrot.slane %v536, 5
      %v539 = vsel %vm515, %v534, %v538
      %v541 = vshrl.u32 %v493, 16
      %v543 = vrot.slane %v541, 4
      %v544 = vshll.u32 %v493, 16
      %v546 = vrot.slane %v544, 5
      %v547 = vor.u32 %v543, %v546
      %v548 = vrot.slane %v547, 4
      %v550 = vshll.u32 %v494, 16
      %v552 = vrot.slane %v550, 5
      %v553 = vsel %vm515, %v548, %v552
      %v554 = vshrl.u32 %v494, 16
      %v556 = vrot.slane %v554, 4
      %v557 = vor.u32 %v556, %v552
      %v558 = vrot.slane %v557, 4
      %v560 = vshll.u32 %v512, 16
      %v562 = vrot.slane %v560, 5
      %v563 = vsel %vm515, %v558, %v562
      %s564 = scalar_lea.vmem %s2, 64
      %v565 = vld [vmem:[%s564] sm:$0xf]
      %v566 = vld [vmem:[%s564 + $0x4] sm:$0xf]
      %v567 = vld [vmem:[%s564 + $0x8] sm:$0xf]
      %v568 = vld [vmem:[%s564 + $0xc] sm:$0xf]
      %v569 = vld [vmem:[%s564 + $0x10] sm:$0xf]
      %v570 = vld [vmem:[%s564 + $0x14] sm:$0xf]
      %v571 = vld [vmem:[%s564 + $0x18] sm:$0xf]
      %v572 = vld [vmem:[%s564 + $0x1c] sm:$0xf]
      %v573 = vld [vmem:[%s564 + $0x20] sm:$0xf]
      %v574 = vld [vmem:[%s564 + $0x24] sm:$0xf]
      %v575 = vld [vmem:[%s564 + $0x28] sm:$0xf]
      %v576 = vld [vmem:[%s564 + $0x2c] sm:$0xf]
      %v577 = vld [vmem:[%s564 + $0x30] sm:$0xf]
      %v578 = vld [vmem:[%s564 + $0x34] sm:$0xf]
      %v579 = vld [vmem:[%s564 + $0x38] sm:$0xf]
      %v580 = vld [vmem:[%s564 + $0x3c] sm:$0xf]
      %v581 = vunpack.c.l.b16 %v529
      %v582 = vunpack.c.l.b16 %v539
      %v583 = vunpack.c.l.b16 %v553
      %v584 = vunpack.c.l.b16 %v563
      %v585 = vpack.c.b16 %v582, %v581
      %v586 = vpack.c.b16 %v584, %v583
      %v605 = vunpack.c.l.b16 %v565
      %v606 = vunpack.c.l.b16 %v566
      %v607 = vunpack.c.l.b16 %v567
      %v608 = vunpack.c.l.b16 %v568
      %v609 = vunpack.c.l.b16 %v569
      %v610 = vunpack.c.l.b16 %v570
      %v611 = vunpack.c.l.b16 %v571
      %v612 = vunpack.c.l.b16 %v572
      %v613 = vunpack.c.l.b16 %v573
      %v614 = vunpack.c.l.b16 %v574
      %v615 = vunpack.c.l.b16 %v575
      %v616 = vunpack.c.l.b16 %v576
      %v617 = vunpack.c.l.b16 %v577
      %v618 = vunpack.c.l.b16 %v578
      %v619 = vunpack.c.l.b16 %v579
      %v620 = vunpack.c.l.b16 %v580
      %v621 = vpack.c.b16 %v606, %v605
      %v622 = vpack.c.b16 %v608, %v607
      %v623 = vpack.c.b16 %v610, %v609
      %v624 = vpack.c.b16 %v612, %v611
      %v625 = vpack.c.b16 %v614, %v613
      %v626 = vpack.c.b16 %v616, %v615
      %v627 = vpack.c.b16 %v618, %v617
      %v628 = vpack.c.b16 %v620, %v619
      %637 = vmatprep.subr.bf16.mxu0 0
      %638 = vmatpush1.bf16.msra.mxu0 %v621
      %639 = vmatprep.subr.bf16.mxu0 0
      %640 = vmatpush1.bf16.msra.mxu0 %v622
      %641 = vmatprep.subr.bf16.mxu0 0
      %642 = vmatpush1.bf16.msra.mxu0 %v623
      %643 = vmatprep.subr.bf16.mxu0 0
      %644 = vmatpush1.bf16.msra.mxu0 %v624
      %645 = vmatprep.subr.bf16.mxu0 0
      %646 = vmatpush1.bf16.msra.mxu0 %v625
      %647 = vmatprep.subr.bf16.mxu0 0
      %648 = vmatpush1.bf16.msra.mxu0 %v626
      %649 = vmatprep.subr.bf16.mxu0 0
      %650 = vmatpush1.bf16.msra.mxu0 %v627
      %651 = vmatprep.subr.bf16.mxu0 0
      %652 = vmatpush1.bf16.msra.mxu0 %v628
      %653 = vmatprep.subr.bf16.mxu0 0
      %654 = vmatpush1.bf16.msra.mxu0 0
      %655 = vmatprep.subr.bf16.mxu0 0
      %656 = vmatpush1.bf16.msra.mxu0 0
      %657 = vmatprep.subr.bf16.mxu0 0
      %658 = vmatpush1.bf16.msra.mxu0 0
      %659 = vmatprep.subr.bf16.mxu0 0
      %660 = vmatpush1.bf16.msra.mxu0 0
      %661 = vmatprep.subr.bf16.mxu0 0
      %662 = vmatpush1.bf16.msra.mxu0 0
      %663 = vmatprep.subr.bf16.mxu0 0
      %664 = vmatpush1.bf16.msra.mxu0 0
      %665 = vmatprep.subr.bf16.mxu0 0
      %666 = vmatpush1.bf16.msra.mxu0 0
      %667 = vmatprep.subr.bf16.mxu0 0
      %668 = vmatpush1.bf16.msra.mxu0 0
      %669 = vmatprep.mubr.bf16.mxu0 0
      %670 = vmatmul.mubr.bf16.gmra.mrb[0].mxu0 %v585
      %v671 = vpop.f32.mrb[0].mxu0
      %v672 = vadd.f32 0.0, %v671
      %v673 = vpop.f32.mrb[0].mxu0
      %v674 = vpop.f32.mrb[0].mxu0
      %v675 = vadd.f32 0.0, %v674
      %v676 = vpop.f32.mrb[0].mxu0
      %677 = vmatprep.mubr.bf16.mxu0 0
      %678 = vmatmul.mubr.bf16.gmra.mrb[0].mxu0 %v586
      %v679 = vpop.f32.mrb[0].mxu0
      %v680 = vadd.f32 0.0, %v679
      %v681 = vpop.f32.mrb[0].mxu0
      %v682 = vpop.f32.mrb[0].mxu0
      %v683 = vadd.f32 0.0, %v682
      %v684 = vpop.f32.mrb[0].mxu0
      %685 = vdwg.mxu0
      %v690 = vunpack.c.l.b16 %v491
      %v691 = vunpack.c.l.b16 %v492
      %v692 = vunpack.c.l.b16 %v493
      %v693 = vunpack.c.l.b16 %v494
      %v694 = vpack.c.b16 %v691, %v690
      %v695 = vpack.c.b16 %v693, %v692
      %v714 = vunpack.c.l.b16 %v495
      %v715 = vunpack.c.l.b16 %v496
      %v716 = vunpack.c.l.b16 %v497
      %v717 = vunpack.c.l.b16 %v498
      %v718 = vunpack.c.l.b16 %v499
      %v719 = vunpack.c.l.b16 %v500
      %v720 = vunpack.c.l.b16 %v501
      %v721 = vunpack.c.l.b16 %v502
      %v722 = vunpack.c.l.b16 %v503
      %v723 = vunpack.c.l.b16 %v504
      %v724 = vunpack.c.l.b16 %v505
      %v725 = vunpack.c.l.b16 %v506
      %v726 = vunpack.c.l.b16 %v507
      %v727 = vunpack.c.l.b16 %v508
      %v728 = vunpack.c.l.b16 %v509
      %v729 = vunpack.c.l.b16 %v510
      %v730 = vpack.c.b16 %v715, %v714
      %v731 = vpack.c.b16 %v717, %v716
      %v732 = vpack.c.b16 %v719, %v718
      %v733 = vpack.c.b16 %v721, %v720
      %v734 = vpack.c.b16 %v723, %v722
      %v735 = vpack.c.b16 %v725, %v724
      %v736 = vpack.c.b16 %v727, %v726
      %v737 = vpack.c.b16 %v729, %v728
      %746 = vmatprep.subr.bf16.mxu0 0
      %747 = vmatpush1.bf16.msra.mxu0 %v730
      %748 = vmatprep.subr.bf16.mxu0 0
      %749 = vmatpush1.bf16.msra.mxu0 %v731
      %750 = vmatprep.subr.bf16.mxu0 0
      %751 = vmatpush1.bf16.msra.mxu0 %v732
      %752 = vmatprep.subr.bf16.mxu0 0
      %753 = vmatpush1.bf16.msra.mxu0 %v733
      %754 = vmatprep.subr.bf16.mxu0 0
      %755 = vmatpush1.bf16.msra.mxu0 %v734
      %756 = vmatprep.subr.bf16.mxu0 0
      %757 = vmatpush1.bf16.msra.mxu0 %v735
      %758 = vmatprep.subr.bf16.mxu0 0
      %759 = vmatpush1.bf16.msra.mxu0 %v736
      %760 = vmatprep.subr.bf16.mxu0 0
      %761 = vmatpush1.bf16.msra.mxu0 %v737
      %762 = vmatprep.subr.bf16.mxu0 0
      %763 = vmatpush1.bf16.msra.mxu0 0
      %764 = vmatprep.subr.bf16.mxu0 0
      %765 = vmatpush1.bf16.msra.mxu0 0
      %766 = vmatprep.subr.bf16.mxu0 0
      %767 = vmatpush1.bf16.msra.mxu0 0
      %768 = vmatprep.subr.bf16.mxu0 0
      %769 = vmatpush1.bf16.msra.mxu0 0
      %770 = vmatprep.subr.bf16.mxu0 0
      %771 = vmatpush1.bf16.msra.mxu0 0
      %772 = vmatprep.subr.bf16.mxu0 0
      %773 = vmatpush1.bf16.msra.mxu0 0
      %774 = vmatprep.subr.bf16.mxu0 0
      %775 = vmatpush1.bf16.msra.mxu0 0
      %776 = vmatprep.subr.bf16.mxu0 0
      %777 = vmatpush1.bf16.msra.mxu0 0
      %778 = vmatprep.mubr.bf16.mxu0 0
      %779 = vmatmul.mubr.bf16.gmra.mrb[0].mxu0 %v694
      %v780 = vpop.f32.mrb[0].mxu0
      %v781 = vadd.f32 %v672, %v780
      %v782 = vpop.f32.mrb[0].mxu0
      %v783 = vpop.f32.mrb[0].mxu0
      %v784 = vadd.f32 %v675, %v783
      %v785 = vpop.f32.mrb[0].mxu0
      %786 = vmatprep.mubr.bf16.mxu0 0
      %787 = vmatmul.mubr.bf16.gmra.mrb[0].mxu0 %v695
      %v788 = vpop.f32.mrb[0].mxu0
      %v789 = vadd.f32 %v680, %v788
      %v790 = vpop.f32.mrb[0].mxu0
      %v791 = vpop.f32.mrb[0].mxu0
      %v792 = vadd.f32 %v683, %v791
      %v793 = vpop.f32.mrb[0].mxu0
      %794 = vdwg.mxu0
      %v795 = vld [vmem:[#allocation2] sm:$0xe]
      %v796 = vld [vmem:[#allocation2 + $0xc] sm:$0xe]
      %vm801 = vcmask 1042432
      %vm802 = vcmask 1046532
      %vm803 = vmor %vm801, %vm802
      %v804 = vrot.slane %v795, 5
      %v805 = vrot.slane %v804, 4
      %v806 = vrot.slane %v492, 5
      %v807 = vsel %vm803, %v805, %v806
      %v808 = vrot.slane %v806, 4
      %v809 = vrot.slane %v511, 5
      %v810 = vsel %vm803, %v808, %v809
      %v811 = vrot.slane %v796, 5
      %v812 = vrot.slane %v811, 4
      %v813 = vrot.slane %v494, 5
      %v814 = vsel %vm803, %v812, %v813
      %v815 = vrot.slane %v813, 4
      %v816 = vrot.slane %v512, 5
      %v817 = vsel %vm803, %v815, %v816
      %s818 = scalar_lea.vmem %s2, 128
      %v819 = vld [vmem:[%s818] sm:$0xf]
      %v820 = vld [vmem:[%s818 + $0x4] sm:$0xf]
      %v821 = vld [vmem:[%s818 + $0x8] sm:$0xf]
      %v822 = vld [vmem:[%s818 + $0xc] sm:$0xf]
      %v823 = vld [vmem:[%s818 + $0x10] sm:$0xf]
      %v824 = vld [vmem:[%s818 + $0x14] sm:$0xf]
      %v825 = vld [vmem:[%s818 + $0x18] sm:$0xf]
      %v826 = vld [vmem:[%s818 + $0x1c] sm:$0xf]
      %v827 = vld [vmem:[%s818 + $0x20] sm:$0xf]
      %v828 = vld [vmem:[%s818 + $0x24] sm:$0xf]
      %v829 = vld [vmem:[%s818 + $0x28] sm:$0xf]
      %v830 = vld [vmem:[%s818 + $0x2c] sm:$0xf]
      %v831 = vld [vmem:[%s818 + $0x30] sm:$0xf]
      %v832 = vld [vmem:[%s818 + $0x34] sm:$0xf]
      %v833 = vld [vmem:[%s818 + $0x38] sm:$0xf]
      %v834 = vld [vmem:[%s818 + $0x3c] sm:$0xf]
      %v835 = vunpack.c.l.b16 %v807
      %v836 = vunpack.c.l.b16 %v810
      %v837 = vunpack.c.l.b16 %v814
      %v838 = vunpack.c.l.b16 %v817
      %v839 = vpack.c.b16 %v836, %v835
      %v840 = vpack.c.b16 %v838, %v837
      %v859 = vunpack.c.l.b16 %v819
      %v860 = vunpack.c.l.b16 %v820
      %v861 = vunpack.c.l.b16 %v821
      %v862 = vunpack.c.l.b16 %v822
      %v863 = vunpack.c.l.b16 %v823
      %v864 = vunpack.c.l.b16 %v824
      %v865 = vunpack.c.l.b16 %v825
      %v866 = vunpack.c.l.b16 %v826
      %v867 = vunpack.c.l.b16 %v827
      %v868 = vunpack.c.l.b16 %v828
      %v869 = vunpack.c.l.b16 %v829
      %v870 = vunpack.c.l.b16 %v830
      %v871 = vunpack.c.l.b16 %v831
      %v872 = vunpack.c.l.b16 %v832
      %v873 = vunpack.c.l.b16 %v833
      %v874 = vunpack.c.l.b16 %v834
      %v875 = vpack.c.b16 %v860, %v859
      %v876 = vpack.c.b16 %v862, %v861
      %v877 = vpack.c.b16 %v864, %v863
      %v878 = vpack.c.b16 %v866, %v865
      %v879 = vpack.c.b16 %v868, %v867
      %v880 = vpack.c.b16 %v870, %v869
      %v881 = vpack.c.b16 %v872, %v871
      %v882 = vpack.c.b16 %v874, %v873
      %891 = vmatprep.subr.bf16.mxu0 0
      %892 = vmatpush1.bf16.msra.mxu0 %v875
      %893 = vmatprep.subr.bf16.mxu0 0
      %894 = vmatpush1.bf16.msra.mxu0 %v876
      %895 = vmatprep.subr.bf16.mxu0 0
      %896 = vmatpush1.bf16.msra.mxu0 %v877
      %897 = vmatprep.subr.bf16.mxu0 0
      %898 = vmatpush1.bf16.msra.mxu0 %v878
      %899 = vmatprep.subr.bf16.mxu0 0
      %900 = vmatpush1.bf16.msra.mxu0 %v879
      %901 = vmatprep.subr.bf16.mxu0 0
      %902 = vmatpush1.bf16.msra.mxu0 %v880
      %903 = vmatprep.subr.bf16.mxu0 0
      %904 = vmatpush1.bf16.msra.mxu0 %v881
      %905 = vmatprep.subr.bf16.mxu0 0
      %906 = vmatpush1.bf16.msra.mxu0 %v882
      %907 = vmatprep.subr.bf16.mxu0 0
      %908 = vmatpush1.bf16.msra.mxu0 0
      %909 = vmatprep.subr.bf16.mxu0 0
      %910 = vmatpush1.bf16.msra.mxu0 0
      %911 = vmatprep.subr.bf16.mxu0 0
      %912 = vmatpush1.bf16.msra.mxu0 0
      %913 = vmatprep.subr.bf16.mxu0 0
      %914 = vmatpush1.bf16.msra.mxu0 0
      %915 = vmatprep.subr.bf16.mxu0 0
      %916 = vmatpush1.bf16.msra.mxu0 0
      %917 = vmatprep.subr.bf16.mxu0 0
      %918 = vmatpush1.bf16.msra.mxu0 0
      %919 = vmatprep.subr.bf16.mxu0 0
      %920 = vmatpush1.bf16.msra.mxu0 0
      %921 = vmatprep.subr.bf16.mxu0 0
      %922 = vmatpush1.bf16.msra.mxu0 0
      %923 = vmatprep.mubr.bf16.mxu0 0
      %924 = vmatmul.mubr.bf16.gmra.mrb[0].mxu0 %v839
      %v925 = vpop.f32.mrb[0].mxu0
      %v926 = vadd.f32 0.0, %v925
      %v927 = vpop.f32.mrb[0].mxu0
      %v928 = vpop.f32.mrb[0].mxu0
      %v929 = vadd.f32 0.0, %v928
      %v930 = vpop.f32.mrb[0].mxu0
      %931 = vmatprep.mubr.bf16.mxu0 0
      %932 = vmatmul.mubr.bf16.gmra.mrb[0].mxu0 %v840
      %v933 = vpop.f32.mrb[0].mxu0
      %v934 = vadd.f32 0.0, %v933
      %v935 = vpop.f32.mrb[0].mxu0
      %v936 = vpop.f32.mrb[0].mxu0
      %v937 = vadd.f32 0.0, %v936
      %v938 = vpop.f32.mrb[0].mxu0
      %939 = vdwg.mxu0
      %v940 = vadd.f32 %v781, %v926
      %v941 = vadd.f32 %v784, %v929
      %v942 = vadd.f32 %v789, %v934
      %v943 = vadd.f32 %v792, %v937
      %v944 = vld [vmem:[#allocation2 + $0x8] sm:$0x3]
      %v945 = vld [vmem:[#allocation2 + $0x14] sm:$0x3]
      %vm946 = vsmask.f32 2304
      %vm947 = vsmask.f32 6416
      %vm948 = vmor %vm946, %vm947
      %v950 = vshrl.u32 %v795, 16
      %v952 = vrot.slane %v950, 5
      %v953 = vshll.u32 %v795, 16
      %v955 = vrot.slane %v953, 6
      %v956 = vor.u32 %v952, %v955
      %v957 = vrot.slane %v956, 4
      %v958 = vrot.slane %v530, 5
      %v959 = vrot.slane %v526, 6
      %v960 = vor.u32 %v958, %v959
      %v961 = vsel %vm948, %v957, %v960
      %v962 = vrot.slane %v960, 4
      %v964 = vshrl.u32 %v944, 16
      %v966 = vrot.slane %v964, 5
      %v967 = vshll.u32 %v944, 16
      %v969 = vrot.slane %v967, 6
      %v970 = vor.u32 %v966, %v969
      %v971 = vsel %vm948, %v962, %v970
      %v973 = vshrl.u32 %v796, 16
      %v975 = vrot.slane %v973, 5
      %v976 = vshll.u32 %v796, 16
      %v978 = vrot.slane %v976, 6
      %v979 = vor.u32 %v975, %v978
      %v980 = vrot.slane %v979, 4
      %v981 = vrot.slane %v554, 5
      %v982 = vrot.slane %v550, 6
      %v983 = vor.u32 %v981, %v982
      %v984 = vsel %vm948, %v980, %v983
      %v985 = vrot.slane %v983, 4
      %v987 = vshrl.u32 %v945, 16
      %v989 = vrot.slane %v987, 5
      %v990 = vshll.u32 %v945, 16
      %v992 = vrot.slane %v990, 6
      %v993 = vor.u32 %v989, %v992
      %v994 = vsel %vm948, %v985, %v993
      %s995 = scalar_lea.vmem %s2, 192
      %v996 = vld [vmem:[%s995] sm:$0xf]
      %v997 = vld [vmem:[%s995 + $0x4] sm:$0xf]
      %v998 = vld [vmem:[%s995 + $0x8] sm:$0xf]
      %v999 = vld [vmem:[%s995 + $0xc] sm:$0xf]
      %v1000 = vld [vmem:[%s995 + $0x10] sm:$0xf]
      %v1001 = vld [vmem:[%s995 + $0x14] sm:$0xf]
      %v1002 = vld [vmem:[%s995 + $0x18] sm:$0xf]
      %v1003 = vld [vmem:[%s995 + $0x1c] sm:$0xf]
      %v1004 = vld [vmem:[%s995 + $0x20] sm:$0xf]
      %v1005 = vld [vmem:[%s995 + $0x24] sm:$0xf]
      %v1006 = vld [vmem:[%s995 + $0x28] sm:$0xf]
      %v1007 = vld [vmem:[%s995 + $0x2c] sm:$0xf]
      %v1008 = vld [vmem:[%s995 + $0x30] sm:$0xf]
      %v1009 = vld [vmem:[%s995 + $0x34] sm:$0xf]
      %v1010 = vld [vmem:[%s995 + $0x38] sm:$0xf]
      %v1011 = vld [vmem:[%s995 + $0x3c] sm:$0xf]
      %v1012 = vunpack.c.l.b16 %v961
      %v1013 = vunpack.c.l.b16 %v971
      %v1014 = vunpack.c.l.b16 %v984
      %v1015 = vunpack.c.l.b16 %v994
      %v1016 = vpack.c.b16 %v1013, %v1012
      %v1017 = vpack.c.b16 %v1015, %v1014
      %v1036 = vunpack.c.l.b16 %v996
      %v1037 = vunpack.c.l.b16 %v997
      %v1038 = vunpack.c.l.b16 %v998
      %v1039 = vunpack.c.l.b16 %v999
      %v1040 = vunpack.c.l.b16 %v1000
      %v1041 = vunpack.c.l.b16 %v1001
      %v1042 = vunpack.c.l.b16 %v1002
      %v1043 = vunpack.c.l.b16 %v1003
      %v1044 = vunpack.c.l.b16 %v1004
      %v1045 = vunpack.c.l.b16 %v1005
      %v1046 = vunpack.c.l.b16 %v1006
      %v1047 = vunpack.c.l.b16 %v1007
      %v1048 = vunpack.c.l.b16 %v1008
      %v1049 = vunpack.c.l.b16 %v1009
      %v1050 = vunpack.c.l.b16 %v1010
      %v1051 = vunpack.c.l.b16 %v1011
      %v1052 = vpack.c.b16 %v1037, %v1036
      %v1053 = vpack.c.b16 %v1039, %v1038
      %v1054 = vpack.c.b16 %v1041, %v1040
      %v1055 = vpack.c.b16 %v1043, %v1042
      %v1056 = vpack.c.b16 %v1045, %v1044
      %v1057 = vpack.c.b16 %v1047, %v1046
      %v1058 = vpack.c.b16 %v1049, %v1048
      %v1059 = vpack.c.b16 %v1051, %v1050
      %1068 = vmatprep.subr.bf16.mxu0 0
      %1069 = vmatpush1.bf16.msra.mxu0 %v1052
      %1070 = vmatprep.subr.bf16.mxu0 0
      %1071 = vmatpush1.bf16.msra.mxu0 %v1053
      %1072 = vmatprep.subr.bf16.mxu0 0
      %1073 = vmatpush1.bf16.msra.mxu0 %v1054
      %1074 = vmatprep.subr.bf16.mxu0 0
      %1075 = vmatpush1.bf16.msra.mxu0 %v1055
      %1076 = vmatprep.subr.bf16.mxu0 0
      %1077 = vmatpush1.bf16.msra.mxu0 %v1056
      %1078 = vmatprep.subr.bf16.mxu0 0
      %1079 = vmatpush1.bf16.msra.mxu0 %v1057
      %1080 = vmatprep.subr.bf16.mxu0 0
      %1081 = vmatpush1.bf16.msra.mxu0 %v1058
      %1082 = vmatprep.subr.bf16.mxu0 0
      %1083 = vmatpush1.bf16.msra.mxu0 %v1059
      %1084 = vmatprep.subr.bf16.mxu0 0
      %1085 = vmatpush1.bf16.msra.mxu0 0
      %1086 = vmatprep.subr.bf16.mxu0 0
      %1087 = vmatpush1.bf16.msra.mxu0 0
      %1088 = vmatprep.subr.bf16.mxu0 0
      %1089 = vmatpush1.bf16.msra.mxu0 0
      %1090 = vmatprep.subr.bf16.mxu0 0
      %1091 = vmatpush1.bf16.msra.mxu0 0
      %1092 = vmatprep.subr.bf16.mxu0 0
      %1093 = vmatpush1.bf16.msra.mxu0 0
      %1094 = vmatprep.subr.bf16.mxu0 0
      %1095 = vmatpush1.bf16.msra.mxu0 0
      %1096 = vmatprep.subr.bf16.mxu0 0
      %1097 = vmatpush1.bf16.msra.mxu0 0
      %1098 = vmatprep.subr.bf16.mxu0 0
      %1099 = vmatpush1.bf16.msra.mxu0 0
      %1100 = vmatprep.mubr.bf16.mxu0 0
      %1101 = vmatmul.mubr.bf16.gmra.mrb[0].mxu0 %v1016
      %v1102 = vpop.f32.mrb[0].mxu0
      %v1103 = vadd.f32 0.0, %v1102
      %v1104 = vpop.f32.mrb[0].mxu0
      %v1105 = vpop.f32.mrb[0].mxu0
      %v1106 = vadd.f32 0.0, %v1105
      %v1107 = vpop.f32.mrb[0].mxu0
      %1108 = vmatprep.mubr.bf16.mxu0 0
      %1109 = vmatmul.mubr.bf16.gmra.mrb[0].mxu0 %v1017
      %v1110 = vpop.f32.mrb[0].mxu0
      %v1111 = vadd.f32 0.0, %v1110
      %v1112 = vpop.f32.mrb[0].mxu0
      %v1113 = vpop.f32.mrb[0].mxu0
      %v1114 = vadd.f32 0.0, %v1113
      %v1115 = vpop.f32.mrb[0].mxu0
      %1116 = vdwg.mxu0
      %v1117 = vadd.f32 %v940, %v1103
      %v1118 = vadd.f32 %v941, %v1106
      %v1119 = vadd.f32 %v942, %v1111
      %v1120 = vadd.f32 %v943, %v1114
      %v1121 = vld [vmem:[#allocation2] sm:$0xc]
      %v1122 = vld [vmem:[#allocation2 + $0xc] sm:$0xc]
      %vm1127 = vcmask 1041408
      %vm1128 = vcmask 1045508
      %vm1129 = vmor %vm1127, %vm1128
      %v1130 = vrot.slane %v1121, 6
      %v1131 = vrot.slane %v1130, 4
      %v1132 = vrot.slane %v492, 6
      %v1133 = vsel %vm1129, %v1131, %v1132
      %v1134 = vrot.slane %v1132, 4
      %v1135 = vrot.slane %v944, 6
      %v1136 = vsel %vm1129, %v1134, %v1135
      %v1137 = vrot.slane %v1122, 6
      %v1138 = vrot.slane %v1137, 4
      %v1139 = vrot.slane %v494, 6
      %v1140 = vsel %vm1129, %v1138, %v1139
      %v1141 = vrot.slane %v1139, 4
      %v1142 = vrot.slane %v945, 6
      %v1143 = vsel %vm1129, %v1141, %v1142
      %s1144 = scalar_lea.vmem %s2, 256
      %v1145 = vld [vmem:[%s1144] sm:$0xf]
      %v1146 = vld [vmem:[%s1144 + $0x4] sm:$0xf]
      %v1147 = vld [vmem:[%s1144 + $0x8] sm:$0xf]
      %v1148 = vld [vmem:[%s1144 + $0xc] sm:$0xf]
      %v1149 = vld [vmem:[%s1144 + $0x10] sm:$0xf]
      %v1150 = vld [vmem:[%s1144 + $0x14] sm:$0xf]
      %v1151 = vld [vmem:[%s1144 + $0x18] sm:$0xf]
      %v1152 = vld [vmem:[%s1144 + $0x1c] sm:$0xf]
      %v1153 = vld [vmem:[%s1144 + $0x20] sm:$0xf]
      %v1154 = vld [vmem:[%s1144 + $0x24] sm:$0xf]
      %v1155 = vld [vmem:[%s1144 + $0x28] sm:$0xf]
      %v1156 = vld [vmem:[%s1144 + $0x2c] sm:$0xf]
      %v1157 = vld [vmem:[%s1144 + $0x30] sm:$0xf]
      %v1158 = vld [vmem:[%s1144 + $0x34] sm:$0xf]
      %v1159 = vld [vmem:[%s1144 + $0x38] sm:$0xf]
      %v1160 = vld [vmem:[%s1144 + $0x3c] sm:$0xf]
      %v1161 = vunpack.c.l.b16 %v1133
      %v1162 = vunpack.c.l.b16 %v1136
      %v1163 = vunpack.c.l.b16 %v1140
      %v1164 = vunpack.c.l.b16 %v1143
      %v1165 = vpack.c.b16 %v1162, %v1161
      %v1166 = vpack.c.b16 %v1164, %v1163
      %v1185 = vunpack.c.l.b16 %v1145
      %v1186 = vunpack.c.l.b16 %v1146
      %v1187 = vunpack.c.l.b16 %v1147
      %v1188 = vunpack.c.l.b16 %v1148
      %v1189 = vunpack.c.l.b16 %v1149
      %v1190 = vunpack.c.l.b16 %v1150
      %v1191 = vunpack.c.l.b16 %v1151
      %v1192 = vunpack.c.l.b16 %v1152
      %v1193 = vunpack.c.l.b16 %v1153
      %v1194 = vunpack.c.l.b16 %v1154
      %v1195 = vunpack.c.l.b16 %v1155
      %v1196 = vunpack.c.l.b16 %v1156
      %v1197 = vunpack.c.l.b16 %v1157
      %v1198 = vunpack.c.l.b16 %v1158
      %v1199 = vunpack.c.l.b16 %v1159
      %v1200 = vunpack.c.l.b16 %v1160
      %v1201 = vpack.c.b16 %v1186, %v1185
      %v1202 = vpack.c.b16 %v1188, %v1187
      %v1203 = vpack.c.b16 %v1190, %v1189
      %v1204 = vpack.c.b16 %v1192, %v1191
      %v1205 = vpack.c.b16 %v1194, %v1193
      %v1206 = vpack.c.b16 %v1196, %v1195
      %v1207 = vpack.c.b16 %v1198, %v1197
      %v1208 = vpack.c.b16 %v1200, %v1199
      %1217 = vmatprep.subr.bf16.mxu0 0
      %1218 = vmatpush1.bf16.msra.mxu0 %v1201
      %1219 = vmatprep.subr.bf16.mxu0 0
      %1220 = vmatpush1.bf16.msra.mxu0 %v1202
      %1221 = vmatprep.subr.bf16.mxu0 0
      %1222 = vmatpush1.bf16.msra.mxu0 %v1203
      %1223 = vmatprep.subr.bf16.mxu0 0
      %1224 = vmatpush1.bf16.msra.mxu0 %v1204
      %1225 = vmatprep.subr.bf16.mxu0 0
      %1226 = vmatpush1.bf16.msra.mxu0 %v1205
      %1227 = vmatprep.subr.bf16.mxu0 0
      %1228 = vmatpush1.bf16.msra.mxu0 %v1206
      %1229 = vmatprep.subr.bf16.mxu0 0
      %1230 = vmatpush1.bf16.msra.mxu0 %v1207
      %1231 = vmatprep.subr.bf16.mxu0 0
      %1232 = vmatpush1.bf16.msra.mxu0 %v1208
      %1233 = vmatprep.subr.bf16.mxu0 0
      %1234 = vmatpush1.bf16.msra.mxu0 0
      %1235 = vmatprep.subr.bf16.mxu0 0
      %1236 = vmatpush1.bf16.msra.mxu0 0
      %1237 = vmatprep.subr.bf16.mxu0 0
      %1238 = vmatpush1.bf16.msra.mxu0 0
      %1239 = vmatprep.subr.bf16.mxu0 0
      %1240 = vmatpush1.bf16.msra.mxu0 0
      %1241 = vmatprep.subr.bf16.mxu0 0
      %1242 = vmatpush1.bf16.msra.mxu0 0
      %1243 = vmatprep.subr.bf16.mxu0 0
      %1244 = vmatpush1.bf16.msra.mxu0 0
      %1245 = vmatprep.subr.bf16.mxu0 0
      %1246 = vmatpush1.bf16.msra.mxu0 0
      %1247 = vmatprep.subr.bf16.mxu0 0
      %1248 = vmatpush1.bf16.msra.mxu0 0
      %1249 = vmatprep.mubr.bf16.mxu0 0
      %1250 = vmatmul.mubr.bf16.gmra.mrb[0].mxu0 %v1165
      %v1251 = vpop.f32.mrb[0].mxu0
      %v1252 = vadd.f32 0.0, %v1251
      %v1253 = vpop.f32.mrb[0].mxu0
      %v1254 = vpop.f32.mrb[0].mxu0
      %v1255 = vadd.f32 0.0, %v1254
      %v1256 = vpop.f32.mrb[0].mxu0
      %1257 = vmatprep.mubr.bf16.mxu0 0
      %1258 = vmatmul.mubr.bf16.gmra.mrb[0].mxu0 %v1166
      %v1259 = vpop.f32.mrb[0].mxu0
      %v1260 = vadd.f32 0.0, %v1259
      %v1261 = vpop.f32.mrb[0].mxu0
      %v1262 = vpop.f32.mrb[0].mxu0
      %v1263 = vadd.f32 0.0, %v1262
      %v1264 = vpop.f32.mrb[0].mxu0
      %1265 = vdwg.mxu0
      %v1266 = vadd.f32 %v1117, %v1252
      %v1267 = vadd.f32 %v1118, %v1255
      %v1268 = vadd.f32 %v1119, %v1260
      %v1269 = vadd.f32 %v1120, %v1263
      %v1270 = vld [vmem:[%s3] sm:$0x1]
      %v1272 = vlaneseq
      %v1273 = vshrl.u32 %v1272, 7
      %v1274 = vsub.s32 0, %v1273
      %v1275 = vrot.slane %v1270, %v1274
      %v1277 = vadd.f32 %v1266, %v1275
      %v1278 = vadd.f32 %v1267, %v1275
      %v1279 = vadd.f32 %v1268, %v1275
      %v1280 = vadd.f32 %v1269, %v1275
      %v1281 = vmax.f32 %v1277, 0.0
      %v1282 = vmax.f32 %v1278, 0.0
      %v1283 = vmax.f32 %v1279, 0.0
      %v1284 = vmax.f32 %v1280, 0.0
      %1286 = vset.pattern.permute.xlu0 0
      %1287 = vperm.xlu0 %1286, %v448
      %v1288 = vpop.permute.xlu0 %1287
      %1291 = vset.pattern.permute.xlu0 0
      %1292 = vperm.xlu0 %1291, %v449
      %v1293 = vpop.permute.xlu0 %1292
      %1296 = vset.pattern.permute.xlu0 0
      %1297 = vperm.xlu0 %1296, %v450
      %v1298 = vpop.permute.xlu0 %1297
      %1301 = vset.pattern.permute.xlu0 0
      %1302 = vperm.xlu0 %1301, %v451
      %v1303 = vpop.permute.xlu0 %1302
      %v1305 = vmul.f32 %v1281, %v1288
      %v1306 = vmul.f32 %v1282, %v1293
      %v1307 = vmul.f32 %v1283, %v1298
      %v1308 = vmul.f32 %v1284, %v1303
      %v1309 = vpack.c.bf16 %v1306, %v1305
      %v1310 = vpack.c.bf16 %v1308, %v1307
      %1311 = vst [vmem:[#allocation2] sm:$0xf] 0
      %1312 = vst [vmem:[#allocation2 + $0x4] sm:$0xf] 0
      %1313 = vst [vmem:[#allocation2 + $0x8] sm:$0x3] 0
      %1314 = vst [vmem:[#allocation2 + $0xc] sm:$0xf] 0
      %1315 = vst [vmem:[#allocation2 + $0x10] sm:$0xf] 0
      %1316 = vst [vmem:[#allocation2 + $0x14] sm:$0x3] 0
      %v1319 = vunpack.c.l.b16 %v1309
      %v1320 = vunpack.c.h.b16 %v1309
      %v1321 = vunpack.c.l.b16 %v1310
      %v1322 = vunpack.c.h.b16 %v1310
      %v1323 = vpack.c.b16 %v1319, %v1319
      %v1324 = vpack.c.b16 %v1320, %v1320
      %v1325 = vpack.c.b16 %v1321, %v1321
      %v1326 = vpack.c.b16 %v1322, %v1322
      %v1327 = vrot.slane %v1323, 7
      %v1328 = vrot.slane %v1327, 4
      %v1329 = vrot.slane %v1324, 7
      %v1330 = vsel %vm468, %v1328, %v1329
      %v1331 = vrot.slane %v1329, 4
      %v1332 = vrot.slane %v1325, 7
      %v1333 = vrot.slane %v1332, 4
      %v1334 = vrot.slane %v1326, 7
      %v1335 = vsel %vm468, %v1333, %v1334
      %v1336 = vrot.slane %v1334, 4
      %1343 = vst [vmem:[#allocation2] sm:$0xe] %v1327
      %1344 = vst [vmem:[#allocation2 + $0x4] sm:$0xf] %v1330
      %1345 = vst [vmem:[#allocation2 + $0x8] sm:$0x1] %v1331
      %1346 = vst [vmem:[#allocation2 + $0xc] sm:$0xe] %v1332
      %1347 = vst [vmem:[#allocation2 + $0x10] sm:$0xf] %v1335
      %1348 = vst [vmem:[#allocation2 + $0x14] sm:$0x1] %v1336
      %v1349 = vld [vmem:[#allocation2] sm:$0xf]
      %v1350 = vld [vmem:[#allocation2 + $0x4] sm:$0xf]
      %v1351 = vld [vmem:[#allocation2 + $0xc] sm:$0xf]
      %v1352 = vld [vmem:[#allocation2 + $0x10] sm:$0xf]
      %v1353 = vld [vmem:[%s4] sm:$0xf]
      %v1354 = vld [vmem:[%s4 + $0x4] sm:$0xf]
      %v1355 = vld [vmem:[%s4 + $0x8] sm:$0xf]
      %v1356 = vld [vmem:[%s4 + $0xc] sm:$0xf]
      %v1357 = vld [vmem:[%s4 + $0x10] sm:$0xf]
      %v1358 = vld [vmem:[%s4 + $0x14] sm:$0xf]
      %v1359 = vld [vmem:[%s4 + $0x18] sm:$0xf]
      %v1360 = vld [vmem:[%s4 + $0x1c] sm:$0xf]
      %v1361 = vld [vmem:[%s4 + $0x20] sm:$0xf]
      %v1362 = vld [vmem:[%s4 + $0x24] sm:$0xf]
      %v1363 = vld [vmem:[%s4 + $0x28] sm:$0xf]
      %v1364 = vld [vmem:[%s4 + $0x2c] sm:$0xf]
      %v1365 = vld [vmem:[%s4 + $0x30] sm:$0xf]
      %v1366 = vld [vmem:[%s4 + $0x34] sm:$0xf]
      %v1367 = vld [vmem:[%s4 + $0x38] sm:$0xf]
      %v1368 = vld [vmem:[%s4 + $0x3c] sm:$0xf]
      %v1369 = vld [vmem:[#allocation2 + $0x8] sm:$0x1]
      %v1370 = vld [vmem:[#allocation2 + $0x14] sm:$0x1]
      %v1372 = vshrl.u32 %v1349, 16
      %v1374 = vrot.slane %v1372, 4
      %v1375 = vshll.u32 %v1349, 16
      %v1377 = vrot.slane %v1375, 5
      %v1378 = vor.u32 %v1374, %v1377
      %v1379 = vrot.slane %v1378, 4
      %v1381 = vshll.u32 %v1350, 16
      %v1383 = vrot.slane %v1381, 5
      %v1384 = vsel %vm515, %v1379, %v1383
      %v1385 = vshrl.u32 %v1350, 16
      %v1387 = vrot.slane %v1385, 4
      %v1388 = vor.u32 %v1387, %v1383
      %v1389 = vrot.slane %v1388, 4
      %v1391 = vshll.u32 %v1369, 16
      %v1393 = vrot.slane %v1391, 5
      %v1394 = vsel %vm515, %v1389, %v1393
      %v1396 = vshrl.u32 %v1351, 16
      %v1398 = vrot.slane %v1396, 4
      %v1399 = vshll.u32 %v1351, 16
      %v1401 = vrot.slane %v1399, 5
      %v1402 = vor.u32 %v1398, %v1401
      %v1403 = vrot.slane %v1402, 4
      %v1405 = vshll.u32 %v1352, 16
      %v1407 = vrot.slane %v1405, 5
      %v1408 = vsel %vm515, %v1403, %v1407
      %v1409 = vshrl.u32 %v1352, 16
      %v1411 = vrot.slane %v1409, 4
      %v1412 = vor.u32 %v1411, %v1407
      %v1413 = vrot.slane %v1412, 4
      %v1415 = vshll.u32 %v1370, 16
      %v1417 = vrot.slane %v1415, 5
      %v1418 = vsel %vm515, %v1413, %v1417
      %s1419 = scalar_lea.vmem %s4, 64
      %v1420 = vld [vmem:[%s1419] sm:$0xf]
      %v1421 = vld [vmem:[%s1419 + $0x4] sm:$0xf]
      %v1422 = vld [vmem:[%s1419 + $0x8] sm:$0xf]
      %v1423 = vld [vmem:[%s1419 + $0xc] sm:$0xf]
      %v1424 = vld [vmem:[%s1419 + $0x10] sm:$0xf]
      %v1425 = vld [vmem:[%s1419 + $0x14] sm:$0xf]
      %v1426 = vld [vmem:[%s1419 + $0x18] sm:$0xf]
      %v1427 = vld [vmem:[%s1419 + $0x1c] sm:$0xf]
      %v1428 = vld [vmem:[%s1419 + $0x20] sm:$0xf]
      %v1429 = vld [vmem:[%s1419 + $0x24] sm:$0xf]
      %v1430 = vld [vmem:[%s1419 + $0x28] sm:$0xf]
      %v1431 = vld [vmem:[%s1419 + $0x2c] sm:$0xf]
      %v1432 = vld [vmem:[%s1419 + $0x30] sm:$0xf]
      %v1433 = vld [vmem:[%s1419 + $0x34] sm:$0xf]
      %v1434 = vld [vmem:[%s1419 + $0x38] sm:$0xf]
      %v1435 = vld [vmem:[%s1419 + $0x3c] sm:$0xf]
      %v1436 = vunpack.c.l.b16 %v1384
      %v1437 = vunpack.c.l.b16 %v1394
      %v1438 = vunpack.c.l.b16 %v1408
      %v1439 = vunpack.c.l.b16 %v1418
      %v1440 = vpack.c.b16 %v1437, %v1436
      %v1441 = vpack.c.b16 %v1439, %v1438
      %v1460 = vunpack.c.l.b16 %v1420
      %v1461 = vunpack.c.l.b16 %v1421
      %v1462 = vunpack.c.l.b16 %v1422
      %v1463 = vunpack.c.l.b16 %v1423
      %v1464 = vunpack.c.l.b16 %v1424
      %v1465 = vunpack.c.l.b16 %v1425
      %v1466 = vunpack.c.l.b16 %v1426
      %v1467 = vunpack.c.l.b16 %v1427
      %v1468 = vunpack.c.l.b16 %v1428
      %v1469 = vunpack.c.l.b16 %v1429
      %v1470 = vunpack.c.l.b16 %v1430
      %v1471 = vunpack.c.l.b16 %v1431
      %v1472 = vunpack.c.l.b16 %v1432
      %v1473 = vunpack.c.l.b16 %v1433
      %v1474 = vunpack.c.l.b16 %v1434
      %v1475 = vunpack.c.l.b16 %v1435
      %v1476 = vpack.c.b16 %v1461, %v1460
      %v1477 = vpack.c.b16 %v1463, %v1462
      %v1478 = vpack.c.b16 %v1465, %v1464
      %v1479 = vpack.c.b16 %v1467, %v1466
      %v1480 = vpack.c.b16 %v1469, %v1468
      %v1481 = vpack.c.b16 %v1471, %v1470
      %v1482 = vpack.c.b16 %v1473, %v1472
      %v1483 = vpack.c.b16 %v1475, %v1474
      %1492 = vmatprep.subr.bf16.mxu0 0
      %1493 = vmatpush1.bf16.msra.mxu0 %v1476
      %1494 = vmatprep.subr.bf16.mxu0 0
      %1495 = vmatpush1.bf16.msra.mxu0 %v1477
      %1496 = vmatprep.subr.bf16.mxu0 0
      %1497 = vmatpush1.bf16.msra.mxu0 %v1478
      %1498 = vmatprep.subr.bf16.mxu0 0
      %1499 = vmatpush1.bf16.msra.mxu0 %v1479
      %1500 = vmatprep.subr.bf16.mxu0 0
      %1501 = vmatpush1.bf16.msra.mxu0 %v1480
      %1502 = vmatprep.subr.bf16.mxu0 0
      %1503 = vmatpush1.bf16.msra.mxu0 %v1481
      %1504 = vmatprep.subr.bf16.mxu0 0
      %1505 = vmatpush1.bf16.msra.mxu0 %v1482
      %1506 = vmatprep.subr.bf16.mxu0 0
      %1507 = vmatpush1.bf16.msra.mxu0 %v1483
      %1508 = vmatprep.subr.bf16.mxu0 0
      %1509 = vmatpush1.bf16.msra.mxu0 0
      %1510 = vmatprep.subr.bf16.mxu0 0
      %1511 = vmatpush1.bf16.msra.mxu0 0
      %1512 = vmatprep.subr.bf16.mxu0 0
      %1513 = vmatpush1.bf16.msra.mxu0 0
      %1514 = vmatprep.subr.bf16.mxu0 0
      %1515 = vmatpush1.bf16.msra.mxu0 0
      %1516 = vmatprep.subr.bf16.mxu0 0
      %1517 = vmatpush1.bf16.msra.mxu0 0
      %1518 = vmatprep.subr.bf16.mxu0 0
      %1519 = vmatpush1.bf16.msra.mxu0 0
      %1520 = vmatprep.subr.bf16.mxu0 0
      %1521 = vmatpush1.bf16.msra.mxu0 0
      %1522 = vmatprep.subr.bf16.mxu0 0
      %1523 = vmatpush1.bf16.msra.mxu0 0
      %1524 = vmatprep.mubr.bf16.mxu0 0
      %1525 = vmatmul.mubr.bf16.gmra.mrb[0].mxu0 %v1440
      %v1526 = vpop.f32.mrb[0].mxu0
      %v1527 = vadd.f32 0.0, %v1526
      %v1528 = vpop.f32.mrb[0].mxu0
      %v1529 = vpop.f32.mrb[0].mxu0
      %v1530 = vadd.f32 0.0, %v1529
      %v1531 = vpop.f32.mrb[0].mxu0
      %1532 = vmatprep.mubr.bf16.mxu0 0
      %1533 = vmatmul.mubr.bf16.gmra.mrb[0].mxu0 %v1441
      %v1534 = vpop.f32.mrb[0].mxu0
      %v1535 = vadd.f32 0.0, %v1534
      %v1536 = vpop.f32.mrb[0].mxu0
      %v1537 = vpop.f32.mrb[0].mxu0
      %v1538 = vadd.f32 0.0, %v1537
      %v1539 = vpop.f32.mrb[0].mxu0
      %1540 = vdwg.mxu0
      %v1545 = vunpack.c.l.b16 %v1349
      %v1546 = vunpack.c.l.b16 %v1350
      %v1547 = vunpack.c.l.b16 %v1351
      %v1548 = vunpack.c.l.b16 %v1352
      %v1549 = vpack.c.b16 %v1546, %v1545
      %v1550 = vpack.c.b16 %v1548, %v1547
      %v1569 = vunpack.c.l.b16 %v1353
      %v1570 = vunpack.c.l.b16 %v1354
      %v1571 = vunpack.c.l.b16 %v1355
      %v1572 = vunpack.c.l.b16 %v1356
      %v1573 = vunpack.c.l.b16 %v1357
      %v1574 = vunpack.c.l.b16 %v1358
      %v1575 = vunpack.c.l.b16 %v1359
      %v1576 = vunpack.c.l.b16 %v1360
      %v1577 = vunpack.c.l.b16 %v1361
      %v1578 = vunpack.c.l.b16 %v1362
      %v1579 = vunpack.c.l.b16 %v1363
      %v1580 = vunpack.c.l.b16 %v1364
      %v1581 = vunpack.c.l.b16 %v1365
      %v1582 = vunpack.c.l.b16 %v1366
      %v1583 = vunpack.c.l.b16 %v1367
      %v1584 = vunpack.c.l.b16 %v1368
      %v1585 = vpack.c.b16 %v1570, %v1569
      %v1586 = vpack.c.b16 %v1572, %v1571
      %v1587 = vpack.c.b16 %v1574, %v1573
      %v1588 = vpack.c.b16 %v1576, %v1575
      %v1589 = vpack.c.b16 %v1578, %v1577
      %v1590 = vpack.c.b16 %v1580, %v1579
      %v1591 = vpack.c.b16 %v1582, %v1581
      %v1592 = vpack.c.b16 %v1584, %v1583
      %1601 = vmatprep.subr.bf16.mxu0 0
      %1602 = vmatpush1.bf16.msra.mxu0 %v1585
      %1603 = vmatprep.subr.bf16.mxu0 0
      %1604 = vmatpush1.bf16.msra.mxu0 %v1586
      %1605 = vmatprep.subr.bf16.mxu0 0
      %1606 = vmatpush1.bf16.msra.mxu0 %v1587
      %1607 = vmatprep.subr.bf16.mxu0 0
      %1608 = vmatpush1.bf16.msra.mxu0 %v1588
      %1609 = vmatprep.subr.bf16.mxu0 0
      %1610 = vmatpush1.bf16.msra.mxu0 %v1589
      %1611 = vmatprep.subr.bf16.mxu0 0
      %1612 = vmatpush1.bf16.msra.mxu0 %v1590
      %1613 = vmatprep.subr.bf16.mxu0 0
      %1614 = vmatpush1.bf16.msra.mxu0 %v1591
      %1615 = vmatprep.subr.bf16.mxu0 0
      %1616 = vmatpush1.bf16.msra.mxu0 %v1592
      %1617 = vmatprep.subr.bf16.mxu0 0
      %1618 = vmatpush1.bf16.msra.mxu0 0
      %1619 = vmatprep.subr.bf16.mxu0 0
      %1620 = vmatpush1.bf16.msra.mxu0 0
      %1621 = vmatprep.subr.bf16.mxu0 0
      %1622 = vmatpush1.bf16.msra.mxu0 0
      %1623 = vmatprep.subr.bf16.mxu0 0
      %1624 = vmatpush1.bf16.msra.mxu0 0
      %1625 = vmatprep.subr.bf16.mxu0 0
      %1626 = vmatpush1.bf16.msra.mxu0 0
      %1627 = vmatprep.subr.bf16.mxu0 0
      %1628 = vmatpush1.bf16.msra.mxu0 0
      %1629 = vmatprep.subr.bf16.mxu0 0
      %1630 = vmatpush1.bf16.msra.mxu0 0
      %1631 = vmatprep.subr.bf16.mxu0 0
      %1632 = vmatpush1.bf16.msra.mxu0 0
      %1633 = vmatprep.mubr.bf16.mxu0 0
      %1634 = vmatmul.mubr.bf16.gmra.mrb[0].mxu0 %v1549
      %v1635 = vpop.f32.mrb[0].mxu0
      %v1636 = vadd.f32 %v1527, %v1635
      %v1637 = vpop.f32.mrb[0].mxu0
      %v1638 = vpop.f32.mrb[0].mxu0
      %v1639 = vadd.f32 %v1530, %v1638
      %v1640 = vpop.f32.mrb[0].mxu0
      %1641 = vmatprep.mubr.bf16.mxu0 0
      %1642 = vmatmul.mubr.bf16.gmra.mrb[0].mxu0 %v1550
      %v1643 = vpop.f32.mrb[0].mxu0
      %v1644 = vadd.f32 %v1535, %v1643
      %v1645 = vpop.f32.mrb[0].mxu0
      %v1646 = vpop.f32.mrb[0].mxu0
      %v1647 = vadd.f32 %v1538, %v1646
      %v1648 = vpop.f32.mrb[0].mxu0
      %1649 = vdwg.mxu0
      %v1650 = vld [vmem:[#allocation2] sm:$0xe]
      %v1651 = vld [vmem:[#allocation2 + $0xc] sm:$0xe]
      %v1656 = vrot.slane %v1650, 5
      %v1657 = vrot.slane %v1656, 4
      %v1658 = vrot.slane %v1350, 5
      %v1659 = vsel %vm803, %v1657, %v1658
      %v1660 = vrot.slane %v1658, 4
      %v1661 = vrot.slane %v1369, 5
      %v1662 = vsel %vm803, %v1660, %v1661
      %v1663 = vrot.slane %v1651, 5
      %v1664 = vrot.slane %v1663, 4
      %v1665 = vrot.slane %v1352, 5
      %v1666 = vsel %vm803, %v1664, %v1665
      %v1667 = vrot.slane %v1665, 4
      %v1668 = vrot.slane %v1370, 5
      %v1669 = vsel %vm803, %v1667, %v1668
      %s1670 = scalar_lea.vmem %s4, 128
      %v1671 = vld [vmem:[%s1670] sm:$0xf]
      %v1672 = vld [vmem:[%s1670 + $0x4] sm:$0xf]
      %v1673 = vld [vmem:[%s1670 + $0x8] sm:$0xf]
      %v1674 = vld [vmem:[%s1670 + $0xc] sm:$0xf]
      %v1675 = vld [vmem:[%s1670 + $0x10] sm:$0xf]
      %v1676 = vld [vmem:[%s1670 + $0x14] sm:$0xf]
      %v1677 = vld [vmem:[%s1670 + $0x18] sm:$0xf]
      %v1678 = vld [vmem:[%s1670 + $0x1c] sm:$0xf]
      %v1679 = vld [vmem:[%s1670 + $0x20] sm:$0xf]
      %v1680 = vld [vmem:[%s1670 + $0x24] sm:$0xf]
      %v1681 = vld [vmem:[%s1670 + $0x28] sm:$0xf]
      %v1682 = vld [vmem:[%s1670 + $0x2c] sm:$0xf]
      %v1683 = vld [vmem:[%s1670 + $0x30] sm:$0xf]
      %v1684 = vld [vmem:[%s1670 + $0x34] sm:$0xf]
      %v1685 = vld [vmem:[%s1670 + $0x38] sm:$0xf]
      %v1686 = vld [vmem:[%s1670 + $0x3c] sm:$0xf]
      %v1687 = vunpack.c.l.b16 %v1659
      %v1688 = vunpack.c.l.b16 %v1662
      %v1689 = vunpack.c.l.b16 %v1666
      %v1690 = vunpack.c.l.b16 %v1669
      %v1691 = vpack.c.b16 %v1688, %v1687
      %v1692 = vpack.c.b16 %v1690, %v1689
      %v1711 = vunpack.c.l.b16 %v1671
      %v1712 = vunpack.c.l.b16 %v1672
      %v1713 = vunpack.c.l.b16 %v1673
      %v1714 = vunpack.c.l.b16 %v1674
      %v1715 = vunpack.c.l.b16 %v1675
      %v1716 = vunpack.c.l.b16 %v1676
      %v1717 = vunpack.c.l.b16 %v1677
      %v1718 = vunpack.c.l.b16 %v1678
      %v1719 = vunpack.c.l.b16 %v1679
      %v1720 = vunpack.c.l.b16 %v1680
      %v1721 = vunpack.c.l.b16 %v1681
      %v1722 = vunpack.c.l.b16 %v1682
      %v1723 = vunpack.c.l.b16 %v1683
      %v1724 = vunpack.c.l.b16 %v1684
      %v1725 = vunpack.c.l.b16 %v1685
      %v1726 = vunpack.c.l.b16 %v1686
      %v1727 = vpack.c.b16 %v1712, %v1711
      %v1728 = vpack.c.b16 %v1714, %v1713
      %v1729 = vpack.c.b16 %v1716, %v1715
      %v1730 = vpack.c.b16 %v1718, %v1717
      %v1731 = vpack.c.b16 %v1720, %v1719
      %v1732 = vpack.c.b16 %v1722, %v1721
      %v1733 = vpack.c.b16 %v1724, %v1723
      %v1734 = vpack.c.b16 %v1726, %v1725
      %1743 = vmatprep.subr.bf16.mxu0 0
      %1744 = vmatpush1.bf16.msra.mxu0 %v1727
      %1745 = vmatprep.subr.bf16.mxu0 0
      %1746 = vmatpush1.bf16.msra.mxu0 %v1728
      %1747 = vmatprep.subr.bf16.mxu0 0
      %1748 = vmatpush1.bf16.msra.mxu0 %v1729
      %1749 = vmatprep.subr.bf16.mxu0 0
      %1750 = vmatpush1.bf16.msra.mxu0 %v1730
      %1751 = vmatprep.subr.bf16.mxu0 0
      %1752 = vmatpush1.bf16.msra.mxu0 %v1731
      %1753 = vmatprep.subr.bf16.mxu0 0
      %1754 = vmatpush1.bf16.msra.mxu0 %v1732
      %1755 = vmatprep.subr.bf16.mxu0 0
      %1756 = vmatpush1.bf16.msra.mxu0 %v1733
      %1757 = vmatprep.subr.bf16.mxu0 0
      %1758 = vmatpush1.bf16.msra.mxu0 %v1734
      %1759 = vmatprep.subr.bf16.mxu0 0
      %1760 = vmatpush1.bf16.msra.mxu0 0
      %1761 = vmatprep.subr.bf16.mxu0 0
      %1762 = vmatpush1.bf16.msra.mxu0 0
      %1763 = vmatprep.subr.bf16.mxu0 0
      %1764 = vmatpush1.bf16.msra.mxu0 0
      %1765 = vmatprep.subr.bf16.mxu0 0
      %1766 = vmatpush1.bf16.msra.mxu0 0
      %1767 = vmatprep.subr.bf16.mxu0 0
      %1768 = vmatpush1.bf16.msra.mxu0 0
      %1769 = vmatprep.subr.bf16.mxu0 0
      %1770 = vmatpush1.bf16.msra.mxu0 0
      %1771 = vmatprep.subr.bf16.mxu0 0
      %1772 = vmatpush1.bf16.msra.mxu0 0
      %1773 = vmatprep.subr.bf16.mxu0 0
      %1774 = vmatpush1.bf16.msra.mxu0 0
      %1775 = vmatprep.mubr.bf16.mxu0 0
      %1776 = vmatmul.mubr.bf16.gmra.mrb[0].mxu0 %v1691
      %v1777 = vpop.f32.mrb[0].mxu0
      %v1778 = vadd.f32 0.0, %v1777
      %v1779 = vpop.f32.mrb[0].mxu0
      %v1780 = vpop.f32.mrb[0].mxu0
      %v1781 = vadd.f32 0.0, %v1780
      %v1782 = vpop.f32.mrb[0].mxu0
      %1783 = vmatprep.mubr.bf16.mxu0 0
      %1784 = vmatmul.mubr.bf16.gmra.mrb[0].mxu0 %v1692
      %v1785 = vpop.f32.mrb[0].mxu0
      %v1786 = vadd.f32 0.0, %v1785
      %v1787 = vpop.f32.mrb[0].mxu0
      %v1788 = vpop.f32.mrb[0].mxu0
      %v1789 = vadd.f32 0.0, %v1788
      %v1790 = vpop.f32.mrb[0].mxu0
      %1791 = vdwg.mxu0
      %v1792 = vadd.f32 %v1636, %v1778
      %v1793 = vadd.f32 %v1639, %v1781
      %v1794 = vadd.f32 %v1644, %v1786
      %v1795 = vadd.f32 %v1647, %v1789
      %v1796 = vld [vmem:[#allocation2 + $0x8] sm:$0x3]
      %v1797 = vld [vmem:[#allocation2 + $0x14] sm:$0x3]
      %v1799 = vshrl.u32 %v1650, 16
      %v1801 = vrot.slane %v1799, 5
      %v1802 = vshll.u32 %v1650, 16
      %v1804 = vrot.slane %v1802, 6
      %v1805 = vor.u32 %v1801, %v1804
      %v1806 = vrot.slane %v1805, 4
      %v1807 = vrot.slane %v1385, 5
      %v1808 = vrot.slane %v1381, 6
      %v1809 = vor.u32 %v1807, %v1808
      %v1810 = vsel %vm948, %v1806, %v1809
      %v1811 = vrot.slane %v1809, 4
      %v1813 = vshrl.u32 %v1796, 16
      %v1815 = vrot.slane %v1813, 5
      %v1816 = vshll.u32 %v1796, 16
      %v1818 = vrot.slane %v1816, 6
      %v1819 = vor.u32 %v1815, %v1818
      %v1820 = vsel %vm948, %v1811, %v1819
      %v1822 = vshrl.u32 %v1651, 16
      %v1824 = vrot.slane %v1822, 5
      %v1825 = vshll.u32 %v1651, 16
      %v1827 = vrot.slane %v1825, 6
      %v1828 = vor.u32 %v1824, %v1827
      %v1829 = vrot.slane %v1828, 4
      %v1830 = vrot.slane %v1409, 5
      %v1831 = vrot.slane %v1405, 6
      %v1832 = vor.u32 %v1830, %v1831
      %v1833 = vsel %vm948, %v1829, %v1832
      %v1834 = vrot.slane %v1832, 4
      %v1836 = vshrl.u32 %v1797, 16
      %v1838 = vrot.slane %v1836, 5
      %v1839 = vshll.u32 %v1797, 16
      %v1841 = vrot.slane %v1839, 6
      %v1842 = vor.u32 %v1838, %v1841
      %v1843 = vsel %vm948, %v1834, %v1842
      %s1844 = scalar_lea.vmem %s4, 192
      %v1845 = vld [vmem:[%s1844] sm:$0xf]
      %v1846 = vld [vmem:[%s1844 + $0x4] sm:$0xf]
      %v1847 = vld [vmem:[%s1844 + $0x8] sm:$0xf]
      %v1848 = vld [vmem:[%s1844 + $0xc] sm:$0xf]
      %v1849 = vld [vmem:[%s1844 + $0x10] sm:$0xf]
      %v1850 = vld [vmem:[%s1844 + $0x14] sm:$0xf]
      %v1851 = vld [vmem:[%s1844 + $0x18] sm:$0xf]
      %v1852 = vld [vmem:[%s1844 + $0x1c] sm:$0xf]
      %v1853 = vld [vmem:[%s1844 + $0x20] sm:$0xf]
      %v1854 = vld [vmem:[%s1844 + $0x24] sm:$0xf]
      %v1855 = vld [vmem:[%s1844 + $0x28] sm:$0xf]
      %v1856 = vld [vmem:[%s1844 + $0x2c] sm:$0xf]
      %v1857 = vld [vmem:[%s1844 + $0x30] sm:$0xf]
      %v1858 = vld [vmem:[%s1844 + $0x34] sm:$0xf]
      %v1859 = vld [vmem:[%s1844 + $0x38] sm:$0xf]
      %v1860 = vld [vmem:[%s1844 + $0x3c] sm:$0xf]
      %v1861 = vunpack.c.l.b16 %v1810
      %v1862 = vunpack.c.l.b16 %v1820
      %v1863 = vunpack.c.l.b16 %v1833
      %v1864 = vunpack.c.l.b16 %v1843
      %v1865 = vpack.c.b16 %v1862, %v1861
      %v1866 = vpack.c.b16 %v1864, %v1863
      %v1885 = vunpack.c.l.b16 %v1845
      %v1886 = vunpack.c.l.b16 %v1846
      %v1887 = vunpack.c.l.b16 %v1847
      %v1888 = vunpack.c.l.b16 %v1848
      %v1889 = vunpack.c.l.b16 %v1849
      %v1890 = vunpack.c.l.b16 %v1850
      %v1891 = vunpack.c.l.b16 %v1851
      %v1892 = vunpack.c.l.b16 %v1852
      %v1893 = vunpack.c.l.b16 %v1853
      %v1894 = vunpack.c.l.b16 %v1854
      %v1895 = vunpack.c.l.b16 %v1855
      %v1896 = vunpack.c.l.b16 %v1856
      %v1897 = vunpack.c.l.b16 %v1857
      %v1898 = vunpack.c.l.b16 %v1858
      %v1899 = vunpack.c.l.b16 %v1859
      %v1900 = vunpack.c.l.b16 %v1860
      %v1901 = vpack.c.b16 %v1886, %v1885
      %v1902 = vpack.c.b16 %v1888, %v1887
      %v1903 = vpack.c.b16 %v1890, %v1889
      %v1904 = vpack.c.b16 %v1892, %v1891
      %v1905 = vpack.c.b16 %v1894, %v1893
      %v1906 = vpack.c.b16 %v1896, %v1895
      %v1907 = vpack.c.b16 %v1898, %v1897
      %v1908 = vpack.c.b16 %v1900, %v1899
      %1917 = vmatprep.subr.bf16.mxu0 0
      %1918 = vmatpush1.bf16.msra.mxu0 %v1901
      %1919 = vmatprep.subr.bf16.mxu0 0
      %1920 = vmatpush1.bf16.msra.mxu0 %v1902
      %1921 = vmatprep.subr.bf16.mxu0 0
      %1922 = vmatpush1.bf16.msra.mxu0 %v1903
      %1923 = vmatprep.subr.bf16.mxu0 0
      %1924 = vmatpush1.bf16.msra.mxu0 %v1904
      %1925 = vmatprep.subr.bf16.mxu0 0
      %1926 = vmatpush1.bf16.msra.mxu0 %v1905
      %1927 = vmatprep.subr.bf16.mxu0 0
      %1928 = vmatpush1.bf16.msra.mxu0 %v1906
      %1929 = vmatprep.subr.bf16.mxu0 0
      %1930 = vmatpush1.bf16.msra.mxu0 %v1907
      %1931 = vmatprep.subr.bf16.mxu0 0
      %1932 = vmatpush1.bf16.msra.mxu0 %v1908
      %1933 = vmatprep.subr.bf16.mxu0 0
      %1934 = vmatpush1.bf16.msra.mxu0 0
      %1935 = vmatprep.subr.bf16.mxu0 0
      %1936 = vmatpush1.bf16.msra.mxu0 0
      %1937 = vmatprep.subr.bf16.mxu0 0
      %1938 = vmatpush1.bf16.msra.mxu0 0
      %1939 = vmatprep.subr.bf16.mxu0 0
      %1940 = vmatpush1.bf16.msra.mxu0 0
      %1941 = vmatprep.subr.bf16.mxu0 0
      %1942 = vmatpush1.bf16.msra.mxu0 0
      %1943 = vmatprep.subr.bf16.mxu0 0
      %1944 = vmatpush1.bf16.msra.mxu0 0
      %1945 = vmatprep.subr.bf16.mxu0 0
      %1946 = vmatpush1.bf16.msra.mxu0 0
      %1947 = vmatprep.subr.bf16.mxu0 0
      %1948 = vmatpush1.bf16.msra.mxu0 0
      %1949 = vmatprep.mubr.bf16.mxu0 0
      %1950 = vmatmul.mubr.bf16.gmra.mrb[0].mxu0 %v1865
      %v1951 = vpop.f32.mrb[0].mxu0
      %v1952 = vadd.f32 0.0, %v1951
      %v1953 = vpop.f32.mrb[0].mxu0
      %v1954 = vpop.f32.mrb[0].mxu0
      %v1955 = vadd.f32 0.0, %v1954
      %v1956 = vpop.f32.mrb[0].mxu0
      %1957 = vmatprep.mubr.bf16.mxu0 0
      %1958 = vmatmul.mubr.bf16.gmra.mrb[0].mxu0 %v1866
      %v1959 = vpop.f32.mrb[0].mxu0
      %v1960 = vadd.f32 0.0, %v1959
      %v1961 = vpop.f32.mrb[0].mxu0
      %v1962 = vpop.f32.mrb[0].mxu0
      %v1963 = vadd.f32 0.0, %v1962
      %v1964 = vpop.f32.mrb[0].mxu0
      %1965 = vdwg.mxu0
      %v1966 = vadd.f32 %v1792, %v1952
      %v1967 = vadd.f32 %v1793, %v1955
      %v1968 = vadd.f32 %v1794, %v1960
      %v1969 = vadd.f32 %v1795, %v1963
      %v1970 = vld [vmem:[#allocation2] sm:$0xc]
      %v1971 = vld [vmem:[#allocation2 + $0xc] sm:$0xc]
      %v1976 = vrot.slane %v1970, 6
      %v1977 = vrot.slane %v1976, 4
      %v1978 = vrot.slane %v1350, 6
      %v1979 = vsel %vm1129, %v1977, %v1978
      %v1980 = vrot.slane %v1978, 4
      %v1981 = vrot.slane %v1796, 6
      %v1982 = vsel %vm1129, %v1980, %v1981
      %v1983 = vrot.slane %v1971, 6
      %v1984 = vrot.slane %v1983, 4
      %v1985 = vrot.slane %v1352, 6
      %v1986 = vsel %vm1129, %v1984, %v1985
      %v1987 = vrot.slane %v1985, 4
      %v1988 = vrot.slane %v1797, 6
      %v1989 = vsel %vm1129, %v1987, %v1988
      %s1990 = scalar_lea.vmem %s4, 256
      %v1991 = vld [vmem:[%s1990] sm:$0xf]
      %v1992 = vld [vmem:[%s1990 + $0x4] sm:$0xf]
      %v1993 = vld [vmem:[%s1990 + $0x8] sm:$0xf]
      %v1994 = vld [vmem:[%s1990 + $0xc] sm:$0xf]
      %v1995 = vld [vmem:[%s1990 + $0x10] sm:$0xf]
      %v1996 = vld [vmem:[%s1990 + $0x14] sm:$0xf]
      %v1997 = vld [vmem:[%s1990 + $0x18] sm:$0xf]
      %v1998 = vld [vmem:[%s1990 + $0x1c] sm:$0xf]
      %v1999 = vld [vmem:[%s1990 + $0x20] sm:$0xf]
      %v2000 = vld [vmem:[%s1990 + $0x24] sm:$0xf]
      %v2001 = vld [vmem:[%s1990 + $0x28] sm:$0xf]
      %v2002 = vld [vmem:[%s1990 + $0x2c] sm:$0xf]
      %v2003 = vld [vmem:[%s1990 + $0x30] sm:$0xf]
      %v2004 = vld [vmem:[%s1990 + $0x34] sm:$0xf]
      %v2005 = vld [vmem:[%s1990 + $0x38] sm:$0xf]
      %v2006 = vld [vmem:[%s1990 + $0x3c] sm:$0xf]
      %v2007 = vunpack.c.l.b16 %v1979
      %v2008 = vunpack.c.l.b16 %v1982
      %v2009 = vunpack.c.l.b16 %v1986
      %v2010 = vunpack.c.l.b16 %v1989
      %v2011 = vpack.c.b16 %v2008, %v2007
      %v2012 = vpack.c.b16 %v2010, %v2009
      %v2031 = vunpack.c.l.b16 %v1991
      %v2032 = vunpack.c.l.b16 %v1992
      %v2033 = vunpack.c.l.b16 %v1993
      %v2034 = vunpack.c.l.b16 %v1994
      %v2035 = vunpack.c.l.b16 %v1995
      %v2036 = vunpack.c.l.b16 %v1996
      %v2037 = vunpack.c.l.b16 %v1997
      %v2038 = vunpack.c.l.b16 %v1998
      %v2039 = vunpack.c.l.b16 %v1999
      %v2040 = vunpack.c.l.b16 %v2000
      %v2041 = vunpack.c.l.b16 %v2001
      %v2042 = vunpack.c.l.b16 %v2002
      %v2043 = vunpack.c.l.b16 %v2003
      %v2044 = vunpack.c.l.b16 %v2004
      %v2045 = vunpack.c.l.b16 %v2005
      %v2046 = vunpack.c.l.b16 %v2006
      %v2047 = vpack.c.b16 %v2032, %v2031
      %v2048 = vpack.c.b16 %v2034, %v2033
      %v2049 = vpack.c.b16 %v2036, %v2035
      %v2050 = vpack.c.b16 %v2038, %v2037
      %v2051 = vpack.c.b16 %v2040, %v2039
      %v2052 = vpack.c.b16 %v2042, %v2041
      %v2053 = vpack.c.b16 %v2044, %v2043
      %v2054 = vpack.c.b16 %v2046, %v2045
      %2063 = vmatprep.subr.bf16.mxu0 0
      %2064 = vmatpush1.bf16.msra.mxu0 %v2047
      %2065 = vmatprep.subr.bf16.mxu0 0
      %2066 = vmatpush1.bf16.msra.mxu0 %v2048
      %2067 = vmatprep.subr.bf16.mxu0 0
      %2068 = vmatpush1.bf16.msra.mxu0 %v2049
      %2069 = vmatprep.subr.bf16.mxu0 0
      %2070 = vmatpush1.bf16.msra.mxu0 %v2050
      %2071 = vmatprep.subr.bf16.mxu0 0
      %2072 = vmatpush1.bf16.msra.mxu0 %v2051
      %2073 = vmatprep.subr.bf16.mxu0 0
      %2074 = vmatpush1.bf16.msra.mxu0 %v2052
      %2075 = vmatprep.subr.bf16.mxu0 0
      %2076 = vmatpush1.bf16.msra.mxu0 %v2053
      %2077 = vmatprep.subr.bf16.mxu0 0
      %2078 = vmatpush1.bf16.msra.mxu0 %v2054
      %2079 = vmatprep.subr.bf16.mxu0 0
      %2080 = vmatpush1.bf16.msra.mxu0 0
      %2081 = vmatprep.subr.bf16.mxu0 0
      %2082 = vmatpush1.bf16.msra.mxu0 0
      %2083 = vmatprep.subr.bf16.mxu0 0
      %2084 = vmatpush1.bf16.msra.mxu0 0
      %2085 = vmatprep.subr.bf16.mxu0 0
      %2086 = vmatpush1.bf16.msra.mxu0 0
      %2087 = vmatprep.subr.bf16.mxu0 0
      %2088 = vmatpush1.bf16.msra.mxu0 0
      %2089 = vmatprep.subr.bf16.mxu0 0
      %2090 = vmatpush1.bf16.msra.mxu0 0
      %2091 = vmatprep.subr.bf16.mxu0 0
      %2092 = vmatpush1.bf16.msra.mxu0 0
      %2093 = vmatprep.subr.bf16.mxu0 0
      %2094 = vmatpush1.bf16.msra.mxu0 0
      %2095 = vmatprep.mubr.bf16.mxu0 0
      %2096 = vmatmul.mubr.bf16.gmra.mrb[0].mxu0 %v2011
      %v2097 = vpop.f32.mrb[0].mxu0
      %v2098 = vadd.f32 0.0, %v2097
      %v2099 = vpop.f32.mrb[0].mxu0
      %v2100 = vpop.f32.mrb[0].mxu0
      %v2101 = vadd.f32 0.0, %v2100
      %v2102 = vpop.f32.mrb[0].mxu0
      %2103 = vmatprep.mubr.bf16.mxu0 0
      %2104 = vmatmul.mubr.bf16.gmra.mrb[0].mxu0 %v2012
      %v2105 = vpop.f32.mrb[0].mxu0
      %v2106 = vadd.f32 0.0, %v2105
      %v2107 = vpop.f32.mrb[0].mxu0
      %v2108 = vpop.f32.mrb[0].mxu0
      %v2109 = vadd.f32 0.0, %v2108
      %v2110 = vpop.f32.mrb[0].mxu0
      %2111 = vdwg.mxu0
      %v2112 = vadd.f32 %v1966, %v2098
      %v2113 = vadd.f32 %v1967, %v2101
      %v2114 = vadd.f32 %v1968, %v2106
      %v2115 = vadd.f32 %v1969, %v2109
      %v2116 = vld [vmem:[%s5] sm:$0x1]
      %v2118 = vlaneseq
      %v2119 = vshrl.u32 %v2118, 7
      %v2120 = vsub.s32 0, %v2119
      %v2121 = vrot.slane %v2116, %v2120
      %v2123 = vadd.f32 %v2112, %v2121
      %v2124 = vadd.f32 %v2113, %v2121
      %v2125 = vadd.f32 %v2114, %v2121
      %v2126 = vadd.f32 %v2115, %v2121
      %v2127 = vmax.f32 %v2123, 0.0
      %v2128 = vmax.f32 %v2124, 0.0
      %v2129 = vmax.f32 %v2125, 0.0
      %v2130 = vmax.f32 %v2126, 0.0
      %v2131 = vmul.f32 %v2127, %v1288
      %v2132 = vmul.f32 %v2128, %v1293
      %v2133 = vmul.f32 %v2129, %v1298
      %v2134 = vmul.f32 %v2130, %v1303
      %v2135 = vpack.c.bf16 %v2132, %v2131
      %v2136 = vpack.c.bf16 %v2134, %v2133
      %v2137 = vld [vmem:[%s6] sm:$0xf]
      %v2138 = vld [vmem:[%s6 + $0x4] sm:$0xf]
      %v2139 = vld [vmem:[%s6 + $0x8] sm:$0xf]
      %v2140 = vld [vmem:[%s6 + $0xc] sm:$0xf]
      %v2141 = vld [vmem:[%s6 + $0x10] sm:$0xf]
      %v2142 = vld [vmem:[%s6 + $0x14] sm:$0xf]
      %v2143 = vld [vmem:[%s6 + $0x18] sm:$0xf]
      %v2144 = vld [vmem:[%s6 + $0x1c] sm:$0xf]
      %v2145 = vld [vmem:[%s6 + $0x20] sm:$0xf]
      %v2146 = vld [vmem:[%s6 + $0x24] sm:$0xf]
      %v2147 = vld [vmem:[%s6 + $0x28] sm:$0xf]
      %v2148 = vld [vmem:[%s6 + $0x2c] sm:$0xf]
      %v2149 = vld [vmem:[%s6 + $0x30] sm:$0xf]
      %v2150 = vld [vmem:[%s6 + $0x34] sm:$0xf]
      %v2151 = vld [vmem:[%s6 + $0x38] sm:$0xf]
      %v2152 = vld [vmem:[%s6 + $0x3c] sm:$0xf]
      %v2153 = vld [vmem:[%s7] sm:$0x1]
      %v2155 = vlaneseq
      %v2156 = vshrl.u32 %v2155, 7
      %v2157 = vsub.s32 0, %v2156
      %v2158 = vrot.slane %v2153, %v2157
      %v2176 = vunpack.c.l.b16 %v2137
      %v2177 = vunpack.c.l.b16 %v2138
      %v2178 = vunpack.c.l.b16 %v2139
      %v2179 = vunpack.c.l.b16 %v2140
      %v2180 = vunpack.c.l.b16 %v2141
      %v2181 = vunpack.c.l.b16 %v2142
      %v2182 = vunpack.c.l.b16 %v2143
      %v2183 = vunpack.c.l.b16 %v2144
      %v2184 = vunpack.c.l.b16 %v2145
      %v2185 = vunpack.c.l.b16 %v2146
      %v2186 = vunpack.c.l.b16 %v2147
      %v2187 = vunpack.c.l.b16 %v2148
      %v2188 = vunpack.c.l.b16 %v2149
      %v2189 = vunpack.c.l.b16 %v2150
      %v2190 = vunpack.c.l.b16 %v2151
      %v2191 = vunpack.c.l.b16 %v2152
      %v2192 = vpack.c.b16 %v2177, %v2176
      %v2193 = vpack.c.b16 %v2179, %v2178
      %v2194 = vpack.c.b16 %v2181, %v2180
      %v2195 = vpack.c.b16 %v2183, %v2182
      %v2196 = vpack.c.b16 %v2185, %v2184
      %v2197 = vpack.c.b16 %v2187, %v2186
      %v2198 = vpack.c.b16 %v2189, %v2188
      %v2199 = vpack.c.b16 %v2191, %v2190
      %2208 = vmatprep.subr.bf16.mxu0 0
      %2209 = vmatpush1.bf16.msra.mxu0 %v2192
      %2210 = vmatprep.subr.bf16.mxu0 0
      %2211 = vmatpush1.bf16.msra.mxu0 %v2193
      %2212 = vmatprep.subr.bf16.mxu0 0
      %2213 = vmatpush1.bf16.msra.mxu0 %v2194
      %2214 = vmatprep.subr.bf16.mxu0 0
      %2215 = vmatpush1.bf16.msra.mxu0 %v2195
      %2216 = vmatprep.subr.bf16.mxu0 0
      %2217 = vmatpush1.bf16.msra.mxu0 %v2196
      %2218 = vmatprep.subr.bf16.mxu0 0
      %2219 = vmatpush1.bf16.msra.mxu0 %v2197
      %2220 = vmatprep.subr.bf16.mxu0 0
      %2221 = vmatpush1.bf16.msra.mxu0 %v2198
      %2222 = vmatprep.subr.bf16.mxu0 0
      %2223 = vmatpush1.bf16.msra.mxu0 %v2199
      %2224 = vmatprep.subr.bf16.mxu0 0
      %2225 = vmatpush1.bf16.msra.mxu0 0
      %2226 = vmatprep.subr.bf16.mxu0 0
      %2227 = vmatpush1.bf16.msra.mxu0 0
      %2228 = vmatprep.subr.bf16.mxu0 0
      %2229 = vmatpush1.bf16.msra.mxu0 0
      %2230 = vmatprep.subr.bf16.mxu0 0
      %2231 = vmatpush1.bf16.msra.mxu0 0
      %2232 = vmatprep.subr.bf16.mxu0 0
      %2233 = vmatpush1.bf16.msra.mxu0 0
      %2234 = vmatprep.subr.bf16.mxu0 0
      %2235 = vmatpush1.bf16.msra.mxu0 0
      %2236 = vmatprep.subr.bf16.mxu0 0
      %2237 = vmatpush1.bf16.msra.mxu0 0
      %2238 = vmatprep.subr.bf16.mxu0 0
      %2239 = vmatpush1.bf16.msra.mxu0 0
      %2240 = vmatprep.mubr.bf16.mxu0 0
      %2241 = vmatmul.mubr.bf16.gmra.mrb[0].mxu0 %v2135
      %v2242 = vpop.f32.mrb[0].mxu0
      %v2243 = vadd.f32 %v2158, %v2242
      %v2244 = vpop.f32.mrb[0].mxu0
      %v2245 = vpop.f32.mrb[0].mxu0
      %v2246 = vadd.f32 %v2158, %v2245
      %v2247 = vpop.f32.mrb[0].mxu0
      %2248 = vmatprep.mubr.bf16.mxu0 0
      %2249 = vmatmul.mubr.bf16.gmra.mrb[0].mxu0 %v2136
      %v2250 = vpop.f32.mrb[0].mxu0
      %v2251 = vadd.f32 %v2158, %v2250
      %v2252 = vpop.f32.mrb[0].mxu0
      %v2253 = vpop.f32.mrb[0].mxu0
      %v2254 = vadd.f32 %v2158, %v2253
      %v2255 = vpop.f32.mrb[0].mxu0
      %2256 = vdwg.mxu0
      %v2257 = vpack.c.bf16 %v2246, %v2243
      %v2258 = vpack.c.bf16 %v2254, %v2251
      %v2259 = vld [vmem:[%s8] sm:$0xf]
      %v2260 = vld [vmem:[%s8 + $0x4] sm:$0xf]
      %v2261 = vld [vmem:[%s8 + $0x8] sm:$0xf]
      %v2262 = vld [vmem:[%s8 + $0xc] sm:$0xf]
      %v2263 = vld [vmem:[%s8 + $0x10] sm:$0xf]
      %v2264 = vld [vmem:[%s8 + $0x14] sm:$0xf]
      %v2265 = vld [vmem:[%s8 + $0x18] sm:$0xf]
      %v2266 = vld [vmem:[%s8 + $0x1c] sm:$0xf]
      %v2267 = vld [vmem:[%s8 + $0x20] sm:$0xf]
      %v2268 = vld [vmem:[%s8 + $0x24] sm:$0xf]
      %v2269 = vld [vmem:[%s8 + $0x28] sm:$0xf]
      %v2270 = vld [vmem:[%s8 + $0x2c] sm:$0xf]
      %v2271 = vld [vmem:[%s8 + $0x30] sm:$0xf]
      %v2272 = vld [vmem:[%s8 + $0x34] sm:$0xf]
      %v2273 = vld [vmem:[%s8 + $0x38] sm:$0xf]
      %v2274 = vld [vmem:[%s8 + $0x3c] sm:$0xf]
      %v2275 = vld [vmem:[%s9] sm:$0x1]
      %v2277 = vlaneseq
      %v2278 = vshrl.u32 %v2277, 7
      %v2279 = vsub.s32 0, %v2278
      %v2280 = vrot.slane %v2275, %v2279
      %v2298 = vunpack.c.l.b16 %v2259
      %v2299 = vunpack.c.l.b16 %v2260
      %v2300 = vunpack.c.l.b16 %v2261
      %v2301 = vunpack.c.l.b16 %v2262
      %v2302 = vunpack.c.l.b16 %v2263
      %v2303 = vunpack.c.l.b16 %v2264
      %v2304 = vunpack.c.l.b16 %v2265
      %v2305 = vunpack.c.l.b16 %v2266
      %v2306 = vunpack.c.l.b16 %v2267
      %v2307 = vunpack.c.l.b16 %v2268
      %v2308 = vunpack.c.l.b16 %v2269
      %v2309 = vunpack.c.l.b16 %v2270
      %v2310 = vunpack.c.l.b16 %v2271
      %v2311 = vunpack.c.l.b16 %v2272
      %v2312 = vunpack.c.l.b16 %v2273
      %v2313 = vunpack.c.l.b16 %v2274
      %v2314 = vpack.c.b16 %v2299, %v2298
      %v2315 = vpack.c.b16 %v2301, %v2300
      %v2316 = vpack.c.b16 %v2303, %v2302
      %v2317 = vpack.c.b16 %v2305, %v2304
      %v2318 = vpack.c.b16 %v2307, %v2306
      %v2319 = vpack.c.b16 %v2309, %v2308
      %v2320 = vpack.c.b16 %v2311, %v2310
      %v2321 = vpack.c.b16 %v2313, %v2312
      %2330 = vmatprep.subr.bf16.mxu0 0
      %2331 = vmatpush1.bf16.msra.mxu0 %v2314
      %2332 = vmatprep.subr.bf16.mxu0 0
      %2333 = vmatpush1.bf16.msra.mxu0 %v2315
      %2334 = vmatprep.subr.bf16.mxu0 0
      %2335 = vmatpush1.bf16.msra.mxu0 %v2316
      %2336 = vmatprep.subr.bf16.mxu0 0
      %2337 = vmatpush1.bf16.msra.mxu0 %v2317
      %2338 = vmatprep.subr.bf16.mxu0 0
      %2339 = vmatpush1.bf16.msra.mxu0 %v2318
      %2340 = vmatprep.subr.bf16.mxu0 0
      %2341 = vmatpush1.bf16.msra.mxu0 %v2319
      %2342 = vmatprep.subr.bf16.mxu0 0
      %2343 = vmatpush1.bf16.msra.mxu0 %v2320
      %2344 = vmatprep.subr.bf16.mxu0 0
      %2345 = vmatpush1.bf16.msra.mxu0 %v2321
      %2346 = vmatprep.subr.bf16.mxu0 0
      %2347 = vmatpush1.bf16.msra.mxu0 0
      %2348 = vmatprep.subr.bf16.mxu0 0
      %2349 = vmatpush1.bf16.msra.mxu0 0
      %2350 = vmatprep.subr.bf16.mxu0 0
      %2351 = vmatpush1.bf16.msra.mxu0 0
      %2352 = vmatprep.subr.bf16.mxu0 0
      %2353 = vmatpush1.bf16.msra.mxu0 0
      %2354 = vmatprep.subr.bf16.mxu0 0
      %2355 = vmatpush1.bf16.msra.mxu0 0
      %2356 = vmatprep.subr.bf16.mxu0 0
      %2357 = vmatpush1.bf16.msra.mxu0 0
      %2358 = vmatprep.subr.bf16.mxu0 0
      %2359 = vmatpush1.bf16.msra.mxu0 0
      %2360 = vmatprep.subr.bf16.mxu0 0
      %2361 = vmatpush1.bf16.msra.mxu0 0
      %2362 = vmatprep.mubr.bf16.mxu0 0
      %2363 = vmatmul.mubr.bf16.gmra.mrb[0].mxu0 %v2257
      %v2364 = vpop.f32.mrb[0].mxu0
      %v2365 = vadd.f32 %v2280, %v2364
      %v2366 = vpop.f32.mrb[0].mxu0
      %v2367 = vpop.f32.mrb[0].mxu0
      %v2368 = vadd.f32 %v2280, %v2367
      %v2369 = vpop.f32.mrb[0].mxu0
      %2370 = vmatprep.mubr.bf16.mxu0 0
      %2371 = vmatmul.mubr.bf16.gmra.mrb[0].mxu0 %v2258
      %v2372 = vpop.f32.mrb[0].mxu0
      %v2373 = vadd.f32 %v2280, %v2372
      %v2374 = vpop.f32.mrb[0].mxu0
      %v2375 = vpop.f32.mrb[0].mxu0
      %v2376 = vadd.f32 %v2280, %v2375
      %v2377 = vpop.f32.mrb[0].mxu0
      %2378 = vdwg.mxu0
      %v2379 = vmax.f32 %v2365, 0.0
      %v2380 = vmax.f32 %v2368, 0.0
      %v2381 = vmax.f32 %v2373, 0.0
      %v2382 = vmax.f32 %v2376, 0.0
      %v2383 = vpack.c.bf16 %v2380, %v2379
      %v2384 = vpack.c.bf16 %v2382, %v2381
      %v2385 = vld [vmem:[%s10] sm:$0xf]
      %v2386 = vld [vmem:[%s10 + $0x4] sm:$0xf]
      %v2387 = vld [vmem:[%s10 + $0x8] sm:$0xf]
      %v2388 = vld [vmem:[%s10 + $0xc] sm:$0xf]
      %v2389 = vld [vmem:[%s10 + $0x10] sm:$0xf]
      %v2390 = vld [vmem:[%s10 + $0x14] sm:$0xf]
      %v2391 = vld [vmem:[%s10 + $0x18] sm:$0xf]
      %v2392 = vld [vmem:[%s10 + $0x1c] sm:$0xf]
      %v2393 = vld [vmem:[%s10 + $0x20] sm:$0xf]
      %v2394 = vld [vmem:[%s10 + $0x24] sm:$0xf]
      %v2395 = vld [vmem:[%s10 + $0x28] sm:$0xf]
      %v2396 = vld [vmem:[%s10 + $0x2c] sm:$0xf]
      %v2397 = vld [vmem:[%s10 + $0x30] sm:$0xf]
      %v2398 = vld [vmem:[%s10 + $0x34] sm:$0xf]
      %v2399 = vld [vmem:[%s10 + $0x38] sm:$0xf]
      %v2400 = vld [vmem:[%s10 + $0x3c] sm:$0xf]
      %v2401 = vld [vmem:[%s11] sm:$0x1]
      %v2403 = vlaneseq
      %v2404 = vshrl.u32 %v2403, 7
      %v2405 = vsub.s32 0, %v2404
      %v2406 = vrot.slane %v2401, %v2405
      %v2424 = vunpack.c.l.b16 %v2385
      %v2425 = vunpack.c.l.b16 %v2386
      %v2426 = vunpack.c.l.b16 %v2387
      %v2427 = vunpack.c.l.b16 %v2388
      %v2428 = vunpack.c.l.b16 %v2389
      %v2429 = vunpack.c.l.b16 %v2390
      %v2430 = vunpack.c.l.b16 %v2391
      %v2431 = vunpack.c.l.b16 %v2392
      %v2432 = vunpack.c.l.b16 %v2393
      %v2433 = vunpack.c.l.b16 %v2394
      %v2434 = vunpack.c.l.b16 %v2395
      %v2435 = vunpack.c.l.b16 %v2396
      %v2436 = vunpack.c.l.b16 %v2397
      %v2437 = vunpack.c.l.b16 %v2398
      %v2438 = vunpack.c.l.b16 %v2399
      %v2439 = vunpack.c.l.b16 %v2400
      %v2440 = vpack.c.b16 %v2425, %v2424
      %v2441 = vpack.c.b16 %v2427, %v2426
      %v2442 = vpack.c.b16 %v2429, %v2428
      %v2443 = vpack.c.b16 %v2431, %v2430
      %v2444 = vpack.c.b16 %v2433, %v2432
      %v2445 = vpack.c.b16 %v2435, %v2434
      %v2446 = vpack.c.b16 %v2437, %v2436
      %v2447 = vpack.c.b16 %v2439, %v2438
      %2456 = vmatprep.subr.bf16.mxu0 0
      %2457 = vmatpush1.bf16.msra.mxu0 %v2440
      %2458 = vmatprep.subr.bf16.mxu0 0
      %2459 = vmatpush1.bf16.msra.mxu0 %v2441
      %2460 = vmatprep.subr.bf16.mxu0 0
      %2461 = vmatpush1.bf16.msra.mxu0 %v2442
      %2462 = vmatprep.subr.bf16.mxu0 0
      %2463 = vmatpush1.bf16.msra.mxu0 %v2443
      %2464 = vmatprep.subr.bf16.mxu0 0
      %2465 = vmatpush1.bf16.msra.mxu0 %v2444
      %2466 = vmatprep.subr.bf16.mxu0 0
      %2467 = vmatpush1.bf16.msra.mxu0 %v2445
      %2468 = vmatprep.subr.bf16.mxu0 0
      %2469 = vmatpush1.bf16.msra.mxu0 %v2446
      %2470 = vmatprep.subr.bf16.mxu0 0
      %2471 = vmatpush1.bf16.msra.mxu0 %v2447
      %2472 = vmatprep.subr.bf16.mxu0 0
      %2473 = vmatpush1.bf16.msra.mxu0 0
      %2474 = vmatprep.subr.bf16.mxu0 0
      %2475 = vmatpush1.bf16.msra.mxu0 0
      %2476 = vmatprep.subr.bf16.mxu0 0
      %2477 = vmatpush1.bf16.msra.mxu0 0
      %2478 = vmatprep.subr.bf16.mxu0 0
      %2479 = vmatpush1.bf16.msra.mxu0 0
      %2480 = vmatprep.subr.bf16.mxu0 0
      %2481 = vmatpush1.bf16.msra.mxu0 0
      %2482 = vmatprep.subr.bf16.mxu0 0
      %2483 = vmatpush1.bf16.msra.mxu0 0
      %2484 = vmatprep.subr.bf16.mxu0 0
      %2485 = vmatpush1.bf16.msra.mxu0 0
      %2486 = vmatprep.subr.bf16.mxu0 0
      %2487 = vmatpush1.bf16.msra.mxu0 0
      %2488 = vmatprep.mubr.bf16.mxu0 0
      %2489 = vmatmul.mubr.bf16.gmra.mrb[0].mxu0 %v2383
      %v2490 = vpop.f32.mrb[0].mxu0
      %v2491 = vadd.f32 %v2406, %v2490
      %v2492 = vpop.f32.mrb[0].mxu0
      %v2493 = vpop.f32.mrb[0].mxu0
      %v2494 = vadd.f32 %v2406, %v2493
      %v2495 = vpop.f32.mrb[0].mxu0
      %2496 = vmatprep.mubr.bf16.mxu0 0
      %2497 = vmatmul.mubr.bf16.gmra.mrb[0].mxu0 %v2384
      %v2498 = vpop.f32.mrb[0].mxu0
      %v2499 = vadd.f32 %v2406, %v2498
      %v2500 = vpop.f32.mrb[0].mxu0
      %v2501 = vpop.f32.mrb[0].mxu0
      %v2502 = vadd.f32 %v2406, %v2501
      %v2503 = vpop.f32.mrb[0].mxu0
      %2504 = vdwg.mxu0
      %2505 = vst [vmem:[%s445] sm:$0xff] %v2491
      %2506 = vst [vmem:[%s445 + $0x8] sm:$0xff] %v2494
      %2507 = vst [vmem:[%s445 + $0x10] sm:$0xff] %v2499
      %2508 = vst [vmem:[%s445 + $0x18] sm:$0xff] %v2502
      %s2509 = smul.u32 2, %s23
      %p2510 = scmp.lt.s32.totalorder %s2509, 3
      %s2511 = scalar_select %p2510, %s2509, 3
      %s2512 = smul.addr %s2511, 2
      %s2513 = smul.addr %s2512, 8
      %s2514 = scalar_lea.vmem %s12, %s2513
      // Predicated region
      $region69: #{dna_classifier_forward.1} parent=67 // pred_check
        %p2515 = pneg %p303
      $region70: #{dna_classifier_forward.1} parent=67 // pred_check_branch
        %2517 = sbr.rel (%p2515) target = $region72
      $region71: #{dna_classifier_forward.1} parent=67 // pred_region
        %s2518 = smul.u32 2, %s23
      $region72: #{dna_classifier_forward.1} parent=67 // pred_fallthru
        _
    $region68: #{dna_classifier_forward.1} parent=5 // pred_fallthru
      _
    %p2519 = scmp.le.s32.totalorder 2, %s18
    // Predicated region
    $region73: #{dna_classifier_forward.1} parent=5 // pred_check
      %p2520 = pneg %p2519
    $region74: #{dna_classifier_forward.1} parent=5 // pred_check_branch
      %2522 = sbr.rel (%p2520) target = $region76
    $region75: #{dna_classifier_forward.1} parent=5 // pred_region
      %s2523 = ssub.s32 %s18, 2
      // Predicated region
      $region77: #{dna_classifier_forward.1} parent=75 // pred_check
        %p2524 = pneg %p309
      $region78: #{dna_classifier_forward.1} parent=75 // pred_check_branch
        %2526 = sbr.rel (%p2524) target = $region80
      $region79: #{dna_classifier_forward.1} parent=75 // pred_region
        %s2527 = smul.u32 2, %s24
        %p2528 = scmp.lt.s32.totalorder %s2527, 3
        %s2529 = scalar_select %p2528, %s2527, 3
        %s2530 = smul.addr %s2529, 2
        %s2531 = smul.addr %s2530, 8
        %s2532 = scalar_lea.vmem %s12, %s2531
      $region80: #{dna_classifier_forward.1} parent=75 // pred_fallthru
        _
    $region76: #{dna_classifier_forward.1} parent=5 // pred_fallthru
      _
  $region6: #{dna_classifier_forward.1} parent=0 // loop_footer
    %s22 = sadd.s32 1, %s18
  $region7: #{dna_classifier_forward.1} parent=0 // loop_footer_branch
    %17 = sbr.rel target = $region3
  $region8: #{dna_classifier_forward.1} parent=0 // loop_exit
    _

</llo_original>
